<compile_context>
chip_gen: v7x
topology: tpu7x:2x2x1
jax: 0.10.0
libtpu: 0.0.40
codegen_flags: <defaults>
</compile_context>

<pallas_src>
import functools

import jax
import jax.numpy as jnp
from jax.experimental import pallas as pl


# ----------------------------------------------------------------------------
# Single fused Pallas kernel: all LSTM layers + ReLU + folded Linear head
# ----------------------------------------------------------------------------
def _fused_lstm_kernel(x_ref, *refs, num_layers, hidden_size, seq_len,
                       batch_pad):
    # refs layout: [wih_0, whh_0, b_0, ..., wih_{L-1}, whh_{L-1}, b_{L-1},
    #               w_head, b_head, out_ref]
    n_lw = 3 * num_layers
    layer_refs = refs[:n_lw]
    w_head_ref, b_head_ref = refs[n_lw], refs[n_lw + 1]
    out_ref = refs[n_lw + 2]

    H, Bp, S, L = hidden_size, batch_pad, seq_len, num_layers

    # Lane mask selecting the 'g' gate lanes [2H, 3H) of a (Bp, 4H) block.
    lane = jax.lax.broadcasted_iota(jnp.int32, (Bp, 4 * H), 1)
    is_g_lane = jnp.logical_and(lane >= 2 * H, lane < 3 * H)

    def gate_act(g):
        # One transcendental pass for the whole lane-dense gate block:
        # sigmoid(x) = 0.5 * tanh(x / 2) + 0.5 ; 'g' lanes get plain tanh.
        # The pre-scale / post scale+add are VPU ops that co-issue.
        pre = jnp.where(is_g_lane, g, 0.5 * g)
        th = jnp.tanh(pre)
        return jnp.where(is_g_lane, th, 0.5 * th + 0.5)

    wih = [layer_refs[3 * l + 0][...] for l in range(L)]   # (in_l, 4H)
    whh = [layer_refs[3 * l + 1][...] for l in range(L)]   # (H, 4H)
    bias = [layer_refs[3 * l + 2][...] for l in range(L)]  # (1, 4H)

    # Hoisted layer-0 input projection (+ pre-added bias) for the whole
    # sequence: one big MXU matmul instead of S tiny ones.
    gx0 = jnp.dot(x_ref[...], wih[0],
                  preferred_element_type=jnp.float32) + bias[0]  # (S*Bp, 4H)

    h = [jnp.zeros((Bp, H), jnp.float32) for _ in range(L)]
    c = [jnp.zeros((Bp, H), jnp.float32) for _ in range(L)]

    # Layer-wavefront recurrence, fully unrolled (small S).  At wave w, layer
    # l processes timestep t = w - l; its input h_{l-1, t} was produced by
    # layer l-1 in the previous wave and is read from the start-of-wave
    # snapshot, so the L chains stay independent within a wave.
    for w in range(S + L - 1):
        h_in = list(h)                       # snapshot at start of the wave
        for l in range(L):
            t = w - l
            if t < 0 or t >= S:
                continue
            if l == 0:
                g = gx0[t * Bp:(t + 1) * Bp, :] + jnp.dot(
                    h_in[0], whh[0], preferred_element_type=jnp.float32)
            else:
                g = (jnp.dot(h_in[l - 1], wih[l],
                             preferred_element_type=jnp.float32)
                     + jnp.dot(h_in[l], whh[l],
                               preferred_element_type=jnp.float32)
                     + bias[l])                                  # (Bp, 4H)
            act = gate_act(g)
            i_g = act[:, 0 * H:1 * H]
            f_g = act[:, 1 * H:2 * H]
            g_g = act[:, 2 * H:3 * H]
            o_g = act[:, 3 * H:4 * H]
            c[l] = f_g * c[l] + i_g * g_g
            h[l] = o_g * jnp.tanh(c[l])

    # Head: ReLU(last hidden of last layer) -> folded Linear (H -> 1).
    y = jnp.maximum(h[L - 1], 0.0)
    out_ref[...] = jnp.dot(y, w_head_ref[...],
                           preferred_element_type=jnp.float32) + b_head_ref[...]


# ----------------------------------------------------------------------------
# Full module forward
# ----------------------------------------------------------------------------
def lstm_module_forward(x, params):
    """x: (batch, seq, input_size) float32 -> (batch,) float32."""
    B, S, in_dim = x.shape
    layers = params["lstm"]
    H = layers[0]["w_hh_t"].shape[0]
    L = len(layers)

    # Pad batch to a full sublane tile so every per-step (Bp, 4H) slice of the
    # hoisted projection is tile-aligned (no masked sublane extracts).
    Bp = 8 * pl.cdiv(B, 8)

    # Time-major, batch-padded, flattened: row (t*Bp + b) = sample b, step t.
    xt = jnp.transpose(x, (1, 0, 2)).astype(jnp.float32)      # (S, B, in)
    xt = jnp.pad(xt, ((0, 0), (0, Bp - B), (0, 0)))           # (S, Bp, in)
    x2d = xt.reshape(S * Bp, in_dim)

    # Fold the two Linear head layers (no nonlinearity between them).
    w_head = params["w1_t"] @ params["w2_t"]                  # (H, 1)
    b_head = params["b1"] @ params["w2_t"] + params["b2"]     # (1, 1)

    args = [x2d]
    for layer in layers:
        args += [layer["w_ih_t"], layer["w_hh_t"], layer["bias"]]
    args += [w_head, b_head]

    # Advisory cost estimate (scheduling hint when embedded in a larger jit).
    flops = 2 * S * Bp * in_dim * 4 * H            # layer-0 hoisted projection
    flops += 2 * S * Bp * H * 4 * H                # layer-0 recurrent matmuls
    flops += (L - 1) * S * 4 * Bp * H * 4 * H      # layers >= 1: input + rec.
    flops += 2 * Bp * H                            # folded head matvec
    transcendentals = S * L * Bp * 5 * H           # one 4H tanh + tanh(c)/step
    bytes_accessed = sum(int(a.size) * 4 for a in args) + Bp * 4

    out = pl.pallas_call(
        functools.partial(_fused_lstm_kernel, num_layers=L, hidden_size=H,
                          seq_len=S, batch_pad=Bp),
        out_shape=jax.ShapeDtypeStruct((Bp, 1), jnp.float32),
        cost_estimate=pl.CostEstimate(flops=flops,
                                      transcendentals=transcendentals,
                                      bytes_accessed=bytes_accessed),
    )(*args)
    return out[:B, 0]                                          # .view(-1)


# ----------------------------------------------------------------------------
# Deterministic parameter init (PyTorch-like uniform(-1/sqrt(fan_in), ...))
# ----------------------------------------------------------------------------
def init_params(key, input_size, hidden_size, num_layers):
    k = 1.0 / jnp.sqrt(jnp.float32(hidden_size))
    params = {"lstm": []}
    for layer in range(num_layers):
        in_dim = input_size if layer == 0 else hidden_size
        key, k1, k2, k3, k4 = jax.random.split(key, 5)
        w_ih = jax.random.uniform(k1, (4 * hidden_size, in_dim), jnp.float32, -k, k)
        w_hh = jax.random.uniform(k2, (4 * hidden_size, hidden_size), jnp.float32, -k, k)
        b_ih = jax.random.uniform(k3, (4 * hidden_size,), jnp.float32, -k, k)
        b_hh = jax.random.uniform(k4, (4 * hidden_size,), jnp.float32, -k, k)
        params["lstm"].append({
            "w_ih_t": w_ih.T,                               # (in_dim, 4H)
            "w_hh_t": w_hh.T,                               # (H, 4H)
            "bias": (b_ih + b_hh).reshape(1, 4 * hidden_size),
        })
    key, k5, k6, k7, k8 = jax.random.split(key, 5)
    kl = 1.0 / jnp.sqrt(jnp.float32(hidden_size))
    w1 = jax.random.uniform(k5, (input_size, hidden_size), jnp.float32, -kl, kl)
    b1 = jax.random.uniform(k6, (input_size,), jnp.float32, -kl, kl)
    kw = 1.0 / jnp.sqrt(jnp.float32(input_size))
    w2 = jax.random.uniform(k7, (1, input_size), jnp.float32, -kw, kw)
    b2 = jax.random.uniform(k8, (1,), jnp.float32, -kw, kw)
    params["w1_t"] = w1.T                                   # (H, input_size)
    params["b1"] = b1.reshape(1, input_size)
    params["w2_t"] = w2.T                                   # (input_size, 1)
    params["b2"] = b2.reshape(1, 1)
    return params


# ----------------------------------------------------------------------------
# Pure-JAX reference (for sanity check)
# ----------------------------------------------------------------------------
def reference_forward(x, params):
    x_seq = jnp.transpose(x, (1, 0, 2)).astype(jnp.float32)
    for layer in params["lstm"]:
        S, B, _ = x_seq.shape
        H = layer["w_hh_t"].shape[0]
        h = jnp.zeros((B, H), jnp.float32)
        c = jnp.zeros((B, H), jnp.float32)
        outs = []
        for t in range(S):
            g = x_seq[t] @ layer["w_ih_t"] + h @ layer["w_hh_t"] + layer["bias"]
            i = jax.nn.sigmoid(g[:, 0 * H:1 * H])
            f = jax.nn.sigmoid(g[:, 1 * H:2 * H])
            gg = jnp.tanh(g[:, 2 * H:3 * H])
            o = jax.nn.sigmoid(g[:, 3 * H:4 * H])
            c = f * c + i * gg
            h = o * jnp.tanh(c)
            outs.append(h)
        x_seq = jnp.stack(outs, axis=0)
    h_last = jnp.maximum(x_seq[-1], 0.0)
    y = h_last @ params["w1_t"] + params["b1"]
    z = y @ params["w2_t"] + params["b2"]
    return z.reshape(-1)


if __name__ == "__main__":
    batch, seq_len = 2, 8
    input_size, hidden_size, num_layers = 4, 32, 2

    key = jax.random.PRNGKey(0)
    key, xkey = jax.random.split(key)
    x = jax.random.normal(xkey, (batch, seq_len, input_size), jnp.float32)

    params = init_params(key, input_size, hidden_size, num_layers)

    out = lstm_module_forward(x, params)
    out = jax.block_until_ready(out)

    ref = reference_forward(x, params)
    assert out.shape == (batch,), out.shape
    assert jnp.allclose(out, ref, atol=1e-3, rtol=1e-3), (out, ref)

    print("KERNEL_OK")
</pallas_src>

<mosaic_0001>
module attributes {stable_mosaic.version = 11 : i64} {
  func.func @_fused_lstm_kernel(%arg0: memref<64x4xf32, #tpu.memory_space<vmem>>, %arg1: memref<4x128xf32, #tpu.memory_space<vmem>>, %arg2: memref<32x128xf32, #tpu.memory_space<vmem>>, %arg3: memref<1x128xf32, #tpu.memory_space<vmem>>, %arg4: memref<32x128xf32, #tpu.memory_space<vmem>>, %arg5: memref<32x128xf32, #tpu.memory_space<vmem>>, %arg6: memref<1x128xf32, #tpu.memory_space<vmem>>, %arg7: memref<32x1xf32, #tpu.memory_space<vmem>>, %arg8: memref<1x1xf32, #tpu.memory_space<vmem>>, %arg9: memref<8x1xf32, #tpu.memory_space<vmem>>) attributes {dimension_semantics = [], scalar_prefetch = 0 : i64, scratch_operands = 0 : i64, tpu.core_type = #tpu.core_type<tc>} {
    %0 = tpu.iota {dimensions = array<i32: 1>} : vector<8x128xi32>
    %c64_i32 = arith.constant 64 : i32
    %1 = vector.broadcast %c64_i32 : i32 to vector<8x128xi32>
    %2 = arith.cmpi sge, %0, %1 : vector<8x128xi32>
    %c96_i32 = arith.constant 96 : i32
    %3 = vector.broadcast %c96_i32 : i32 to vector<8x128xi32>
    %4 = arith.cmpi slt, %0, %3 : vector<8x128xi32>
    %5 = arith.andi %2, %4 : vector<8x128xi1>
    %c0 = arith.constant 0 : index
    %c0_0 = arith.constant 0 : index
    %6 = vector.load %arg1[%c0, %c0_0] : memref<4x128xf32, #tpu.memory_space<vmem>>, vector<4x128xf32>
    %c0_1 = arith.constant 0 : index
    %c0_2 = arith.constant 0 : index
    %7 = vector.load %arg4[%c0_1, %c0_2] : memref<32x128xf32, #tpu.memory_space<vmem>>, vector<32x128xf32>
    %c0_3 = arith.constant 0 : index
    %c0_4 = arith.constant 0 : index
    %8 = vector.load %arg2[%c0_3, %c0_4] : memref<32x128xf32, #tpu.memory_space<vmem>>, vector<32x128xf32>
    %c0_5 = arith.constant 0 : index
    %c0_6 = arith.constant 0 : index
    %9 = vector.load %arg5[%c0_5, %c0_6] : memref<32x128xf32, #tpu.memory_space<vmem>>, vector<32x128xf32>
    %c0_7 = arith.constant 0 : index
    %c0_8 = arith.constant 0 : index
    %10 = vector.load %arg3[%c0_7, %c0_8] : memref<1x128xf32, #tpu.memory_space<vmem>>, vector<1x128xf32>
    %c0_9 = arith.constant 0 : index
    %c0_10 = arith.constant 0 : index
    %11 = vector.load %arg6[%c0_9, %c0_10] : memref<1x128xf32, #tpu.memory_space<vmem>>, vector<1x128xf32>
    %c0_11 = arith.constant 0 : index
    %c0_12 = arith.constant 0 : index
    %12 = vector.load %arg0[%c0_11, %c0_12] : memref<64x4xf32, #tpu.memory_space<vmem>>, vector<64x4xf32>
    %cst = arith.constant dense<0.000000e+00> : vector<64x128xf32>
    %13 = tpu.matmul %12, %6, %cst {dimension_numbers = #tpu.dot_dimension_numbers<[1], [0], [0], [1], [0, 0, 1, 1], [], []>} : vector<64x4xf32>, vector<4x128xf32>, vector<64x128xf32> -> vector<64x128xf32>
    %14 = vector.broadcast %10 : vector<1x128xf32> to vector<64x128xf32>
    %15 = arith.addf %13, %14 : vector<64x128xf32>
    %cst_13 = arith.constant 0.000000e+00 : f32
    %16 = vector.broadcast %cst_13 : f32 to vector<8x32xf32>
    %cst_14 = arith.constant 0.000000e+00 : f32
    %17 = vector.broadcast %cst_14 : f32 to vector<8x32xf32>
    %cst_15 = arith.constant 0.000000e+00 : f32
    %18 = vector.broadcast %cst_15 : f32 to vector<8x32xf32>
    %cst_16 = arith.constant 0.000000e+00 : f32
    %19 = vector.broadcast %cst_16 : f32 to vector<8x32xf32>
    %20 = vector.extract_strided_slice %15 {offsets = [0, 0], sizes = [8, 128], strides = [1, 1]} : vector<64x128xf32> to vector<8x128xf32>
    %cst_17 = arith.constant dense<0.000000e+00> : vector<8x128xf32>
    %21 = tpu.matmul %16, %8, %cst_17 {dimension_numbers = #tpu.dot_dimension_numbers<[1], [0], [0], [1], [0, 0, 1, 1], [], []>} : vector<8x32xf32>, vector<32x128xf32>, vector<8x128xf32> -> vector<8x128xf32>
    %22 = arith.addf %20, %21 : vector<8x128xf32>
    %cst_18 = arith.constant 5.000000e-01 : f32
    %23 = vector.broadcast %cst_18 : f32 to vector<8x128xf32>
    %24 = arith.mulf %23, %22 : vector<8x128xf32>
    %25 = arith.select %5, %22, %24 : vector<8x128xi1>, vector<8x128xf32>
    %26 = math.tanh %25 : vector<8x128xf32>
    %cst_19 = arith.constant 5.000000e-01 : f32
    %27 = vector.broadcast %cst_19 : f32 to vector<8x128xf32>
    %28 = arith.mulf %27, %26 : vector<8x128xf32>
    %cst_20 = arith.constant 5.000000e-01 : f32
    %29 = vector.broadcast %cst_20 : f32 to vector<8x128xf32>
    %30 = arith.addf %28, %29 : vector<8x128xf32>
    %31 = arith.select %5, %26, %30 : vector<8x128xi1>, vector<8x128xf32>
    %32 = vector.extract_strided_slice %31 {offsets = [0, 0], sizes = [8, 32], strides = [1, 1]} : vector<8x128xf32> to vector<8x32xf32>
    %33 = vector.extract_strided_slice %31 {offsets = [0, 32], sizes = [8, 32], strides = [1, 1]} : vector<8x128xf32> to vector<8x32xf32>
    %34 = vector.extract_strided_slice %31 {offsets = [0, 64], sizes = [8, 32], strides = [1, 1]} : vector<8x128xf32> to vector<8x32xf32>
    %35 = vector.extract_strided_slice %31 {offsets = [0, 96], sizes = [8, 32], strides = [1, 1]} : vector<8x128xf32> to vector<8x32xf32>
    %36 = arith.mulf %33, %18 : vector<8x32xf32>
    %37 = arith.mulf %32, %34 : vector<8x32xf32>
    %38 = arith.addf %36, %37 : vector<8x32xf32>
    %39 = math.tanh %38 : vector<8x32xf32>
    %40 = arith.mulf %35, %39 : vector<8x32xf32>
    %41 = vector.extract_strided_slice %15 {offsets = [8, 0], sizes = [8, 128], strides = [1, 1]} : vector<64x128xf32> to vector<8x128xf32>
    %cst_21 = arith.constant dense<0.000000e+00> : vector<8x128xf32>
    %42 = tpu.matmul %40, %8, %cst_21 {dimension_numbers = #tpu.dot_dimension_numbers<[1], [0], [0], [1], [0, 0, 1, 1], [], []>} : vector<8x32xf32>, vector<32x128xf32>, vector<8x128xf32> -> vector<8x128xf32>
    %43 = arith.addf %41, %42 : vector<8x128xf32>
    %cst_22 = arith.constant 5.000000e-01 : f32
    %44 = vector.broadcast %cst_22 : f32 to vector<8x128xf32>
    %45 = arith.mulf %44, %43 : vector<8x128xf32>
    %46 = arith.select %5, %43, %45 : vector<8x128xi1>, vector<8x128xf32>
    %47 = math.tanh %46 : vector<8x128xf32>
    %cst_23 = arith.constant 5.000000e-01 : f32
    %48 = vector.broadcast %cst_23 : f32 to vector<8x128xf32>
    %49 = arith.mulf %48, %47 : vector<8x128xf32>
    %cst_24 = arith.constant 5.000000e-01 : f32
    %50 = vector.broadcast %cst_24 : f32 to vector<8x128xf32>
    %51 = arith.addf %49, %50 : vector<8x128xf32>
    %52 = arith.select %5, %47, %51 : vector<8x128xi1>, vector<8x128xf32>
    %53 = vector.extract_strided_slice %52 {offsets = [0, 0], sizes = [8, 32], strides = [1, 1]} : vector<8x128xf32> to vector<8x32xf32>
    %54 = vector.extract_strided_slice %52 {offsets = [0, 32], sizes = [8, 32], strides = [1, 1]} : vector<8x128xf32> to vector<8x32xf32>
    %55 = vector.extract_strided_slice %52 {offsets = [0, 64], sizes = [8, 32], strides = [1, 1]} : vector<8x128xf32> to vector<8x32xf32>
    %56 = vector.extract_strided_slice %52 {offsets = [0, 96], sizes = [8, 32], strides = [1, 1]} : vector<8x128xf32> to vector<8x32xf32>
    %57 = arith.mulf %54, %38 : vector<8x32xf32>
    %58 = arith.mulf %53, %55 : vector<8x32xf32>
    %59 = arith.addf %57, %58 : vector<8x32xf32>
    %60 = math.tanh %59 : vector<8x32xf32>
    %61 = arith.mulf %56, %60 : vector<8x32xf32>
    %cst_25 = arith.constant dense<0.000000e+00> : vector<8x128xf32>
    %62 = tpu.matmul %40, %7, %cst_25 {dimension_numbers = #tpu.dot_dimension_numbers<[1], [0], [0], [1], [0, 0, 1, 1], [], []>} : vector<8x32xf32>, vector<32x128xf32>, vector<8x128xf32> -> vector<8x128xf32>
    %cst_26 = arith.constant dense<0.000000e+00> : vector<8x128xf32>
    %63 = tpu.matmul %17, %9, %cst_26 {dimension_numbers = #tpu.dot_dimension_numbers<[1], [0], [0], [1], [0, 0, 1, 1], [], []>} : vector<8x32xf32>, vector<32x128xf32>, vector<8x128xf32> -> vector<8x128xf32>
    %64 = arith.addf %62, %63 : vector<8x128xf32>
    %65 = vector.broadcast %11 : vector<1x128xf32> to vector<8x128xf32>
    %66 = arith.addf %64, %65 : vector<8x128xf32>
    %cst_27 = arith.constant 5.000000e-01 : f32
    %67 = vector.broadcast %cst_27 : f32 to vector<8x128xf32>
    %68 = arith.mulf %67, %66 : vector<8x128xf32>
    %69 = arith.select %5, %66, %68 : vector<8x128xi1>, vector<8x128xf32>
    %70 = math.tanh %69 : vector<8x128xf32>
    %cst_28 = arith.constant 5.000000e-01 : f32
    %71 = vector.broadcast %cst_28 : f32 to vector<8x128xf32>
    %72 = arith.mulf %71, %70 : vector<8x128xf32>
    %cst_29 = arith.constant 5.000000e-01 : f32
    %73 = vector.broadcast %cst_29 : f32 to vector<8x128xf32>
    %74 = arith.addf %72, %73 : vector<8x128xf32>
    %75 = arith.select %5, %70, %74 : vector<8x128xi1>, vector<8x128xf32>
    %76 = vector.extract_strided_slice %75 {offsets = [0, 0], sizes = [8, 32], strides = [1, 1]} : vector<8x128xf32> to vector<8x32xf32>
    %77 = vector.extract_strided_slice %75 {offsets = [0, 32], sizes = [8, 32], strides = [1, 1]} : vector<8x128xf32> to vector<8x32xf32>
    %78 = vector.extract_strided_slice %75 {offsets = [0, 64], sizes = [8, 32], strides = [1, 1]} : vector<8x128xf32> to vector<8x32xf32>
    %79 = vector.extract_strided_slice %75 {offsets = [0, 96], sizes = [8, 32], strides = [1, 1]} : vector<8x128xf32> to vector<8x32xf32>
    %80 = arith.mulf %77, %19 : vector<8x32xf32>
    %81 = arith.mulf %76, %78 : vector<8x32xf32>
    %82 = arith.addf %80, %81 : vector<8x32xf32>
    %83 = math.tanh %82 : vector<8x32xf32>
    %84 = arith.mulf %79, %83 : vector<8x32xf32>
    %85 = vector.extract_strided_slice %15 {offsets = [16, 0], sizes = [8, 128], strides = [1, 1]} : vector<64x128xf32> to vector<8x128xf32>
    %cst_30 = arith.constant dense<0.000000e+00> : vector<8x128xf32>
    %86 = tpu.matmul %61, %8, %cst_30 {dimension_numbers = #tpu.dot_dimension_numbers<[1], [0], [0], [1], [0, 0, 1, 1], [], []>} : vector<8x32xf32>, vector<32x128xf32>, vector<8x128xf32> -> vector<8x128xf32>
    %87 = arith.addf %85, %86 : vector<8x128xf32>
    %cst_31 = arith.constant 5.000000e-01 : f32
    %88 = vector.broadcast %cst_31 : f32 to vector<8x128xf32>
    %89 = arith.mulf %88, %87 : vector<8x128xf32>
    %90 = arith.select %5, %87, %89 : vector<8x128xi1>, vector<8x128xf32>
    %91 = math.tanh %90 : vector<8x128xf32>
    %cst_32 = arith.constant 5.000000e-01 : f32
    %92 = vector.broadcast %cst_32 : f32 to vector<8x128xf32>
    %93 = arith.mulf %92, %91 : vector<8x128xf32>
    %cst_33 = arith.constant 5.000000e-01 : f32
    %94 = vector.broadcast %cst_33 : f32 to vector<8x128xf32>
    %95 = arith.addf %93, %94 : vector<8x128xf32>
    %96 = arith.select %5, %91, %95 : vector<8x128xi1>, vector<8x128xf32>
    %97 = vector.extract_strided_slice %96 {offsets = [0, 0], sizes = [8, 32], strides = [1, 1]} : vector<8x128xf32> to vector<8x32xf32>
    %98 = vector.extract_strided_slice %96 {offsets = [0, 32], sizes = [8, 32], strides = [1, 1]} : vector<8x128xf32> to vector<8x32xf32>
    %99 = vector.extract_strided_slice %96 {offsets = [0, 64], sizes = [8, 32], strides = [1, 1]} : vector<8x128xf32> to vector<8x32xf32>
    %100 = vector.extract_strided_slice %96 {offsets = [0, 96], sizes = [8, 32], strides = [1, 1]} : vector<8x128xf32> to vector<8x32xf32>
    %101 = arith.mulf %98, %59 : vector<8x32xf32>
    %102 = arith.mulf %97, %99 : vector<8x32xf32>
    %103 = arith.addf %101, %102 : vector<8x32xf32>
    %104 = math.tanh %103 : vector<8x32xf32>
    %105 = arith.mulf %100, %104 : vector<8x32xf32>
    %cst_34 = arith.constant dense<0.000000e+00> : vector<8x128xf32>
    %106 = tpu.matmul %61, %7, %cst_34 {dimension_numbers = #tpu.dot_dimension_numbers<[1], [0], [0], [1], [0, 0, 1, 1], [], []>} : vector<8x32xf32>, vector<32x128xf32>, vector<8x128xf32> -> vector<8x128xf32>
    %cst_35 = arith.constant dense<0.000000e+00> : vector<8x128xf32>
    %107 = tpu.matmul %84, %9, %cst_35 {dimension_numbers = #tpu.dot_dimension_numbers<[1], [0], [0], [1], [0, 0, 1, 1], [], []>} : vector<8x32xf32>, vector<32x128xf32>, vector<8x128xf32> -> vector<8x128xf32>
    %108 = arith.addf %106, %107 : vector<8x128xf32>
    %109 = vector.broadcast %11 : vector<1x128xf32> to vector<8x128xf32>
    %110 = arith.addf %108, %109 : vector<8x128xf32>
    %cst_36 = arith.constant 5.000000e-01 : f32
    %111 = vector.broadcast %cst_36 : f32 to vector<8x128xf32>
    %112 = arith.mulf %111, %110 : vector<8x128xf32>
    %113 = arith.select %5, %110, %112 : vector<8x128xi1>, vector<8x128xf32>
    %114 = math.tanh %113 : vector<8x128xf32>
    %cst_37 = arith.constant 5.000000e-01 : f32
    %115 = vector.broadcast %cst_37 : f32 to vector<8x128xf32>
    %116 = arith.mulf %115, %114 : vector<8x128xf32>
    %cst_38 = arith.constant 5.000000e-01 : f32
    %117 = vector.broadcast %cst_38 : f32 to vector<8x128xf32>
    %118 = arith.addf %116, %117 : vector<8x128xf32>
    %119 = arith.select %5, %114, %118 : vector<8x128xi1>, vector<8x128xf32>
    %120 = vector.extract_strided_slice %119 {offsets = [0, 0], sizes = [8, 32], strides = [1, 1]} : vector<8x128xf32> to vector<8x32xf32>
    %121 = vector.extract_strided_slice %119 {offsets = [0, 32], sizes = [8, 32], strides = [1, 1]} : vector<8x128xf32> to vector<8x32xf32>
    %122 = vector.extract_strided_slice %119 {offsets = [0, 64], sizes = [8, 32], strides = [1, 1]} : vector<8x128xf32> to vector<8x32xf32>
    %123 = vector.extract_strided_slice %119 {offsets = [0, 96], sizes = [8, 32], strides = [1, 1]} : vector<8x128xf32> to vector<8x32xf32>
    %124 = arith.mulf %121, %82 : vector<8x32xf32>
    %125 = arith.mulf %120, %122 : vector<8x32xf32>
    %126 = arith.addf %124, %125 : vector<8x32xf32>
    %127 = math.tanh %126 : vector<8x32xf32>
    %128 = arith.mulf %123, %127 : vector<8x32xf32>
    %129 = vector.extract_strided_slice %15 {offsets = [24, 0], sizes = [8, 128], strides = [1, 1]} : vector<64x128xf32> to vector<8x128xf32>
    %cst_39 = arith.constant dense<0.000000e+00> : vector<8x128xf32>
    %130 = tpu.matmul %105, %8, %cst_39 {dimension_numbers = #tpu.dot_dimension_numbers<[1], [0], [0], [1], [0, 0, 1, 1], [], []>} : vector<8x32xf32>, vector<32x128xf32>, vector<8x128xf32> -> vector<8x128xf32>
    %131 = arith.addf %129, %130 : vector<8x128xf32>
    %cst_40 = arith.constant 5.000000e-01 : f32
    %132 = vector.broadcast %cst_40 : f32 to vector<8x128xf32>
    %133 = arith.mulf %132, %131 : vector<8x128xf32>
    %134 = arith.select %5, %131, %133 : vector<8x128xi1>, vector<8x128xf32>
    %135 = math.tanh %134 : vector<8x128xf32>
    %cst_41 = arith.constant 5.000000e-01 : f32
    %136 = vector.broadcast %cst_41 : f32 to vector<8x128xf32>
    %137 = arith.mulf %136, %135 : vector<8x128xf32>
    %cst_42 = arith.constant 5.000000e-01 : f32
    %138 = vector.broadcast %cst_42 : f32 to vector<8x128xf32>
    %139 = arith.addf %137, %138 : vector<8x128xf32>
    %140 = arith.select %5, %135, %139 : vector<8x128xi1>, vector<8x128xf32>
    %141 = vector.extract_strided_slice %140 {offsets = [0, 0], sizes = [8, 32], strides = [1, 1]} : vector<8x128xf32> to vector<8x32xf32>
    %142 = vector.extract_strided_slice %140 {offsets = [0, 32], sizes = [8, 32], strides = [1, 1]} : vector<8x128xf32> to vector<8x32xf32>
    %143 = vector.extract_strided_slice %140 {offsets = [0, 64], sizes = [8, 32], strides = [1, 1]} : vector<8x128xf32> to vector<8x32xf32>
    %144 = vector.extract_strided_slice %140 {offsets = [0, 96], sizes = [8, 32], strides = [1, 1]} : vector<8x128xf32> to vector<8x32xf32>
    %145 = arith.mulf %142, %103 : vector<8x32xf32>
    %146 = arith.mulf %141, %143 : vector<8x32xf32>
    %147 = arith.addf %145, %146 : vector<8x32xf32>
    %148 = math.tanh %147 : vector<8x32xf32>
    %149 = arith.mulf %144, %148 : vector<8x32xf32>
    %cst_43 = arith.constant dense<0.000000e+00> : vector<8x128xf32>
    %150 = tpu.matmul %105, %7, %cst_43 {dimension_numbers = #tpu.dot_dimension_numbers<[1], [0], [0], [1], [0, 0, 1, 1], [], []>} : vector<8x32xf32>, vector<32x128xf32>, vector<8x128xf32> -> vector<8x128xf32>
    %cst_44 = arith.constant dense<0.000000e+00> : vector<8x128xf32>
    %151 = tpu.matmul %128, %9, %cst_44 {dimension_numbers = #tpu.dot_dimension_numbers<[1], [0], [0], [1], [0, 0, 1, 1], [], []>} : vector<8x32xf32>, vector<32x128xf32>, vector<8x128xf32> -> vector<8x128xf32>
    %152 = arith.addf %150, %151 : vector<8x128xf32>
    %153 = vector.broadcast %11 : vector<1x128xf32> to vector<8x128xf32>
    %154 = arith.addf %152, %153 : vector<8x128xf32>
    %cst_45 = arith.constant 5.000000e-01 : f32
    %155 = vector.broadcast %cst_45 : f32 to vector<8x128xf32>
    %156 = arith.mulf %155, %154 : vector<8x128xf32>
    %157 = arith.select %5, %154, %156 : vector<8x128xi1>, vector<8x128xf32>
    %158 = math.tanh %157 : vector<8x128xf32>
    %cst_46 = arith.constant 5.000000e-01 : f32
    %159 = vector.broadcast %cst_46 : f32 to vector<8x128xf32>
    %160 = arith.mulf %159, %158 : vector<8x128xf32>
    %cst_47 = arith.constant 5.000000e-01 : f32
    %161 = vector.broadcast %cst_47 : f32 to vector<8x128xf32>
    %162 = arith.addf %160, %161 : vector<8x128xf32>
    %163 = arith.select %5, %158, %162 : vector<8x128xi1>, vector<8x128xf32>
    %164 = vector.extract_strided_slice %163 {offsets = [0, 0], sizes = [8, 32], strides = [1, 1]} : vector<8x128xf32> to vector<8x32xf32>
    %165 = vector.extract_strided_slice %163 {offsets = [0, 32], sizes = [8, 32], strides = [1, 1]} : vector<8x128xf32> to vector<8x32xf32>
    %166 = vector.extract_strided_slice %163 {offsets = [0, 64], sizes = [8, 32], strides = [1, 1]} : vector<8x128xf32> to vector<8x32xf32>
    %167 = vector.extract_strided_slice %163 {offsets = [0, 96], sizes = [8, 32], strides = [1, 1]} : vector<8x128xf32> to vector<8x32xf32>
    %168 = arith.mulf %165, %126 : vector<8x32xf32>
    %169 = arith.mulf %164, %166 : vector<8x32xf32>
    %170 = arith.addf %168, %169 : vector<8x32xf32>
    %171 = math.tanh %170 : vector<8x32xf32>
    %172 = arith.mulf %167, %171 : vector<8x32xf32>
    %173 = vector.extract_strided_slice %15 {offsets = [32, 0], sizes = [8, 128], strides = [1, 1]} : vector<64x128xf32> to vector<8x128xf32>
    %cst_48 = arith.constant dense<0.000000e+00> : vector<8x128xf32>
    %174 = tpu.matmul %149, %8, %cst_48 {dimension_numbers = #tpu.dot_dimension_numbers<[1], [0], [0], [1], [0, 0, 1, 1], [], []>} : vector<8x32xf32>, vector<32x128xf32>, vector<8x128xf32> -> vector<8x128xf32>
    %175 = arith.addf %173, %174 : vector<8x128xf32>
    %cst_49 = arith.constant 5.000000e-01 : f32
    %176 = vector.broadcast %cst_49 : f32 to vector<8x128xf32>
    %177 = arith.mulf %176, %175 : vector<8x128xf32>
    %178 = arith.select %5, %175, %177 : vector<8x128xi1>, vector<8x128xf32>
    %179 = math.tanh %178 : vector<8x128xf32>
    %cst_50 = arith.constant 5.000000e-01 : f32
    %180 = vector.broadcast %cst_50 : f32 to vector<8x128xf32>
    %181 = arith.mulf %180, %179 : vector<8x128xf32>
    %cst_51 = arith.constant 5.000000e-01 : f32
    %182 = vector.broadcast %cst_51 : f32 to vector<8x128xf32>
    %183 = arith.addf %181, %182 : vector<8x128xf32>
    %184 = arith.select %5, %179, %183 : vector<8x128xi1>, vector<8x128xf32>
    %185 = vector.extract_strided_slice %184 {offsets = [0, 0], sizes = [8, 32], strides = [1, 1]} : vector<8x128xf32> to vector<8x32xf32>
    %186 = vector.extract_strided_slice %184 {offsets = [0, 32], sizes = [8, 32], strides = [1, 1]} : vector<8x128xf32> to vector<8x32xf32>
    %187 = vector.extract_strided_slice %184 {offsets = [0, 64], sizes = [8, 32], strides = [1, 1]} : vector<8x128xf32> to vector<8x32xf32>
    %188 = vector.extract_strided_slice %184 {offsets = [0, 96], sizes = [8, 32], strides = [1, 1]} : vector<8x128xf32> to vector<8x32xf32>
    %189 = arith.mulf %186, %147 : vector<8x32xf32>
    %190 = arith.mulf %185, %187 : vector<8x32xf32>
    %191 = arith.addf %189, %190 : vector<8x32xf32>
    %192 = math.tanh %191 : vector<8x32xf32>
    %193 = arith.mulf %188, %192 : vector<8x32xf32>
    %cst_52 = arith.constant dense<0.000000e+00> : vector<8x128xf32>
    %194 = tpu.matmul %149, %7, %cst_52 {dimension_numbers = #tpu.dot_dimension_numbers<[1], [0], [0], [1], [0, 0, 1, 1], [], []>} : vector<8x32xf32>, vector<32x128xf32>, vector<8x128xf32> -> vector<8x128xf32>
    %cst_53 = arith.constant dense<0.000000e+00> : vector<8x128xf32>
    %195 = tpu.matmul %172, %9, %cst_53 {dimension_numbers = #tpu.dot_dimension_numbers<[1], [0], [0], [1], [0, 0, 1, 1], [], []>} : vector<8x32xf32>, vector<32x128xf32>, vector<8x128xf32> -> vector<8x128xf32>
    %196 = arith.addf %194, %195 : vector<8x128xf32>
    %197 = vector.broadcast %11 : vector<1x128xf32> to vector<8x128xf32>
    %198 = arith.addf %196, %197 : vector<8x128xf32>
    %cst_54 = arith.constant 5.000000e-01 : f32
    %199 = vector.broadcast %cst_54 : f32 to vector<8x128xf32>
    %200 = arith.mulf %199, %198 : vector<8x128xf32>
    %201 = arith.select %5, %198, %200 : vector<8x128xi1>, vector<8x128xf32>
    %202 = math.tanh %201 : vector<8x128xf32>
    %cst_55 = arith.constant 5.000000e-01 : f32
    %203 = vector.broadcast %cst_55 : f32 to vector<8x128xf32>
    %204 = arith.mulf %203, %202 : vector<8x128xf32>
    %cst_56 = arith.constant 5.000000e-01 : f32
    %205 = vector.broadcast %cst_56 : f32 to vector<8x128xf32>
    %206 = arith.addf %204, %205 : vector<8x128xf32>
    %207 = arith.select %5, %202, %206 : vector<8x128xi1>, vector<8x128xf32>
    %208 = vector.extract_strided_slice %207 {offsets = [0, 0], sizes = [8, 32], strides = [1, 1]} : vector<8x128xf32> to vector<8x32xf32>
    %209 = vector.extract_strided_slice %207 {offsets = [0, 32], sizes = [8, 32], strides = [1, 1]} : vector<8x128xf32> to vector<8x32xf32>
    %210 = vector.extract_strided_slice %207 {offsets = [0, 64], sizes = [8, 32], strides = [1, 1]} : vector<8x128xf32> to vector<8x32xf32>
    %211 = vector.extract_strided_slice %207 {offsets = [0, 96], sizes = [8, 32], strides = [1, 1]} : vector<8x128xf32> to vector<8x32xf32>
    %212 = arith.mulf %209, %170 : vector<8x32xf32>
    %213 = arith.mulf %208, %210 : vector<8x32xf32>
    %214 = arith.addf %212, %213 : vector<8x32xf32>
    %215 = math.tanh %214 : vector<8x32xf32>
    %216 = arith.mulf %211, %215 : vector<8x32xf32>
    %217 = vector.extract_strided_slice %15 {offsets = [40, 0], sizes = [8, 128], strides = [1, 1]} : vector<64x128xf32> to vector<8x128xf32>
    %cst_57 = arith.constant dense<0.000000e+00> : vector<8x128xf32>
    %218 = tpu.matmul %193, %8, %cst_57 {dimension_numbers = #tpu.dot_dimension_numbers<[1], [0], [0], [1], [0, 0, 1, 1], [], []>} : vector<8x32xf32>, vector<32x128xf32>, vector<8x128xf32> -> vector<8x128xf32>
    %219 = arith.addf %217, %218 : vector<8x128xf32>
    %cst_58 = arith.constant 5.000000e-01 : f32
    %220 = vector.broadcast %cst_58 : f32 to vector<8x128xf32>
    %221 = arith.mulf %220, %219 : vector<8x128xf32>
    %222 = arith.select %5, %219, %221 : vector<8x128xi1>, vector<8x128xf32>
    %223 = math.tanh %222 : vector<8x128xf32>
    %cst_59 = arith.constant 5.000000e-01 : f32
    %224 = vector.broadcast %cst_59 : f32 to vector<8x128xf32>
    %225 = arith.mulf %224, %223 : vector<8x128xf32>
    %cst_60 = arith.constant 5.000000e-01 : f32
    %226 = vector.broadcast %cst_60 : f32 to vector<8x128xf32>
    %227 = arith.addf %225, %226 : vector<8x128xf32>
    %228 = arith.select %5, %223, %227 : vector<8x128xi1>, vector<8x128xf32>
    %229 = vector.extract_strided_slice %228 {offsets = [0, 0], sizes = [8, 32], strides = [1, 1]} : vector<8x128xf32> to vector<8x32xf32>
    %230 = vector.extract_strided_slice %228 {offsets = [0, 32], sizes = [8, 32], strides = [1, 1]} : vector<8x128xf32> to vector<8x32xf32>
    %231 = vector.extract_strided_slice %228 {offsets = [0, 64], sizes = [8, 32], strides = [1, 1]} : vector<8x128xf32> to vector<8x32xf32>
    %232 = vector.extract_strided_slice %228 {offsets = [0, 96], sizes = [8, 32], strides = [1, 1]} : vector<8x128xf32> to vector<8x32xf32>
    %233 = arith.mulf %230, %191 : vector<8x32xf32>
    %234 = arith.mulf %229, %231 : vector<8x32xf32>
    %235 = arith.addf %233, %234 : vector<8x32xf32>
    %236 = math.tanh %235 : vector<8x32xf32>
    %237 = arith.mulf %232, %236 : vector<8x32xf32>
    %cst_61 = arith.constant dense<0.000000e+00> : vector<8x128xf32>
    %238 = tpu.matmul %193, %7, %cst_61 {dimension_numbers = #tpu.dot_dimension_numbers<[1], [0], [0], [1], [0, 0, 1, 1], [], []>} : vector<8x32xf32>, vector<32x128xf32>, vector<8x128xf32> -> vector<8x128xf32>
    %cst_62 = arith.constant dense<0.000000e+00> : vector<8x128xf32>
    %239 = tpu.matmul %216, %9, %cst_62 {dimension_numbers = #tpu.dot_dimension_numbers<[1], [0], [0], [1], [0, 0, 1, 1], [], []>} : vector<8x32xf32>, vector<32x128xf32>, vector<8x128xf32> -> vector<8x128xf32>
    %240 = arith.addf %238, %239 : vector<8x128xf32>
    %241 = vector.broadcast %11 : vector<1x128xf32> to vector<8x128xf32>
    %242 = arith.addf %240, %241 : vector<8x128xf32>
    %cst_63 = arith.constant 5.000000e-01 : f32
    %243 = vector.broadcast %cst_63 : f32 to vector<8x128xf32>
    %244 = arith.mulf %243, %242 : vector<8x128xf32>
    %245 = arith.select %5, %242, %244 : vector<8x128xi1>, vector<8x128xf32>
    %246 = math.tanh %245 : vector<8x128xf32>
    %cst_64 = arith.constant 5.000000e-01 : f32
    %247 = vector.broadcast %cst_64 : f32 to vector<8x128xf32>
    %248 = arith.mulf %247, %246 : vector<8x128xf32>
    %cst_65 = arith.constant 5.000000e-01 : f32
    %249 = vector.broadcast %cst_65 : f32 to vector<8x128xf32>
    %250 = arith.addf %248, %249 : vector<8x128xf32>
    %251 = arith.select %5, %246, %250 : vector<8x128xi1>, vector<8x128xf32>
    %252 = vector.extract_strided_slice %251 {offsets = [0, 0], sizes = [8, 32], strides = [1, 1]} : vector<8x128xf32> to vector<8x32xf32>
    %253 = vector.extract_strided_slice %251 {offsets = [0, 32], sizes = [8, 32], strides = [1, 1]} : vector<8x128xf32> to vector<8x32xf32>
    %254 = vector.extract_strided_slice %251 {offsets = [0, 64], sizes = [8, 32], strides = [1, 1]} : vector<8x128xf32> to vector<8x32xf32>
    %255 = vector.extract_strided_slice %251 {offsets = [0, 96], sizes = [8, 32], strides = [1, 1]} : vector<8x128xf32> to vector<8x32xf32>
    %256 = arith.mulf %253, %214 : vector<8x32xf32>
    %257 = arith.mulf %252, %254 : vector<8x32xf32>
    %258 = arith.addf %256, %257 : vector<8x32xf32>
    %259 = math.tanh %258 : vector<8x32xf32>
    %260 = arith.mulf %255, %259 : vector<8x32xf32>
    %261 = vector.extract_strided_slice %15 {offsets = [48, 0], sizes = [8, 128], strides = [1, 1]} : vector<64x128xf32> to vector<8x128xf32>
    %cst_66 = arith.constant dense<0.000000e+00> : vector<8x128xf32>
    %262 = tpu.matmul %237, %8, %cst_66 {dimension_numbers = #tpu.dot_dimension_numbers<[1], [0], [0], [1], [0, 0, 1, 1], [], []>} : vector<8x32xf32>, vector<32x128xf32>, vector<8x128xf32> -> vector<8x128xf32>
    %263 = arith.addf %261, %262 : vector<8x128xf32>
    %cst_67 = arith.constant 5.000000e-01 : f32
    %264 = vector.broadcast %cst_67 : f32 to vector<8x128xf32>
    %265 = arith.mulf %264, %263 : vector<8x128xf32>
    %266 = arith.select %5, %263, %265 : vector<8x128xi1>, vector<8x128xf32>
    %267 = math.tanh %266 : vector<8x128xf32>
    %cst_68 = arith.constant 5.000000e-01 : f32
    %268 = vector.broadcast %cst_68 : f32 to vector<8x128xf32>
    %269 = arith.mulf %268, %267 : vector<8x128xf32>
    %cst_69 = arith.constant 5.000000e-01 : f32
    %270 = vector.broadcast %cst_69 : f32 to vector<8x128xf32>
    %271 = arith.addf %269, %270 : vector<8x128xf32>
    %272 = arith.select %5, %267, %271 : vector<8x128xi1>, vector<8x128xf32>
    %273 = vector.extract_strided_slice %272 {offsets = [0, 0], sizes = [8, 32], strides = [1, 1]} : vector<8x128xf32> to vector<8x32xf32>
    %274 = vector.extract_strided_slice %272 {offsets = [0, 32], sizes = [8, 32], strides = [1, 1]} : vector<8x128xf32> to vector<8x32xf32>
    %275 = vector.extract_strided_slice %272 {offsets = [0, 64], sizes = [8, 32], strides = [1, 1]} : vector<8x128xf32> to vector<8x32xf32>
    %276 = vector.extract_strided_slice %272 {offsets = [0, 96], sizes = [8, 32], strides = [1, 1]} : vector<8x128xf32> to vector<8x32xf32>
    %277 = arith.mulf %274, %235 : vector<8x32xf32>
    %278 = arith.mulf %273, %275 : vector<8x32xf32>
    %279 = arith.addf %277, %278 : vector<8x32xf32>
    %280 = math.tanh %279 : vector<8x32xf32>
    %281 = arith.mulf %276, %280 : vector<8x32xf32>
    %cst_70 = arith.constant dense<0.000000e+00> : vector<8x128xf32>
    %282 = tpu.matmul %237, %7, %cst_70 {dimension_numbers = #tpu.dot_dimension_numbers<[1], [0], [0], [1], [0, 0, 1, 1], [], []>} : vector<8x32xf32>, vector<32x128xf32>, vector<8x128xf32> -> vector<8x128xf32>
    %cst_71 = arith.constant dense<0.000000e+00> : vector<8x128xf32>
    %283 = tpu.matmul %260, %9, %cst_71 {dimension_numbers = #tpu.dot_dimension_numbers<[1], [0], [0], [1], [0, 0, 1, 1], [], []>} : vector<8x32xf32>, vector<32x128xf32>, vector<8x128xf32> -> vector<8x128xf32>
    %284 = arith.addf %282, %283 : vector<8x128xf32>
    %285 = vector.broadcast %11 : vector<1x128xf32> to vector<8x128xf32>
    %286 = arith.addf %284, %285 : vector<8x128xf32>
    %cst_72 = arith.constant 5.000000e-01 : f32
    %287 = vector.broadcast %cst_72 : f32 to vector<8x128xf32>
    %288 = arith.mulf %287, %286 : vector<8x128xf32>
    %289 = arith.select %5, %286, %288 : vector<8x128xi1>, vector<8x128xf32>
    %290 = math.tanh %289 : vector<8x128xf32>
    %cst_73 = arith.constant 5.000000e-01 : f32
    %291 = vector.broadcast %cst_73 : f32 to vector<8x128xf32>
    %292 = arith.mulf %291, %290 : vector<8x128xf32>
    %cst_74 = arith.constant 5.000000e-01 : f32
    %293 = vector.broadcast %cst_74 : f32 to vector<8x128xf32>
    %294 = arith.addf %292, %293 : vector<8x128xf32>
    %295 = arith.select %5, %290, %294 : vector<8x128xi1>, vector<8x128xf32>
    %296 = vector.extract_strided_slice %295 {offsets = [0, 0], sizes = [8, 32], strides = [1, 1]} : vector<8x128xf32> to vector<8x32xf32>
    %297 = vector.extract_strided_slice %295 {offsets = [0, 32], sizes = [8, 32], strides = [1, 1]} : vector<8x128xf32> to vector<8x32xf32>
    %298 = vector.extract_strided_slice %295 {offsets = [0, 64], sizes = [8, 32], strides = [1, 1]} : vector<8x128xf32> to vector<8x32xf32>
    %299 = vector.extract_strided_slice %295 {offsets = [0, 96], sizes = [8, 32], strides = [1, 1]} : vector<8x128xf32> to vector<8x32xf32>
    %300 = arith.mulf %297, %258 : vector<8x32xf32>
    %301 = arith.mulf %296, %298 : vector<8x32xf32>
    %302 = arith.addf %300, %301 : vector<8x32xf32>
    %303 = math.tanh %302 : vector<8x32xf32>
    %304 = arith.mulf %299, %303 : vector<8x32xf32>
    %305 = vector.extract_strided_slice %15 {offsets = [56, 0], sizes = [8, 128], strides = [1, 1]} : vector<64x128xf32> to vector<8x128xf32>
    %cst_75 = arith.constant dense<0.000000e+00> : vector<8x128xf32>
    %306 = tpu.matmul %281, %8, %cst_75 {dimension_numbers = #tpu.dot_dimension_numbers<[1], [0], [0], [1], [0, 0, 1, 1], [], []>} : vector<8x32xf32>, vector<32x128xf32>, vector<8x128xf32> -> vector<8x128xf32>
    %307 = arith.addf %305, %306 : vector<8x128xf32>
    %cst_76 = arith.constant 5.000000e-01 : f32
    %308 = vector.broadcast %cst_76 : f32 to vector<8x128xf32>
    %309 = arith.mulf %308, %307 : vector<8x128xf32>
    %310 = arith.select %5, %307, %309 : vector<8x128xi1>, vector<8x128xf32>
    %311 = math.tanh %310 : vector<8x128xf32>
    %cst_77 = arith.constant 5.000000e-01 : f32
    %312 = vector.broadcast %cst_77 : f32 to vector<8x128xf32>
    %313 = arith.mulf %312, %311 : vector<8x128xf32>
    %cst_78 = arith.constant 5.000000e-01 : f32
    %314 = vector.broadcast %cst_78 : f32 to vector<8x128xf32>
    %315 = arith.addf %313, %314 : vector<8x128xf32>
    %316 = arith.select %5, %311, %315 : vector<8x128xi1>, vector<8x128xf32>
    %317 = vector.extract_strided_slice %316 {offsets = [0, 0], sizes = [8, 32], strides = [1, 1]} : vector<8x128xf32> to vector<8x32xf32>
    %318 = vector.extract_strided_slice %316 {offsets = [0, 32], sizes = [8, 32], strides = [1, 1]} : vector<8x128xf32> to vector<8x32xf32>
    %319 = vector.extract_strided_slice %316 {offsets = [0, 64], sizes = [8, 32], strides = [1, 1]} : vector<8x128xf32> to vector<8x32xf32>
    %320 = vector.extract_strided_slice %316 {offsets = [0, 96], sizes = [8, 32], strides = [1, 1]} : vector<8x128xf32> to vector<8x32xf32>
    %321 = arith.mulf %318, %279 : vector<8x32xf32>
    %322 = arith.mulf %317, %319 : vector<8x32xf32>
    %323 = arith.addf %321, %322 : vector<8x32xf32>
    %324 = math.tanh %323 : vector<8x32xf32>
    %325 = arith.mulf %320, %324 : vector<8x32xf32>
    %cst_79 = arith.constant dense<0.000000e+00> : vector<8x128xf32>
    %326 = tpu.matmul %281, %7, %cst_79 {dimension_numbers = #tpu.dot_dimension_numbers<[1], [0], [0], [1], [0, 0, 1, 1], [], []>} : vector<8x32xf32>, vector<32x128xf32>, vector<8x128xf32> -> vector<8x128xf32>
    %cst_80 = arith.constant dense<0.000000e+00> : vector<8x128xf32>
    %327 = tpu.matmul %304, %9, %cst_80 {dimension_numbers = #tpu.dot_dimension_numbers<[1], [0], [0], [1], [0, 0, 1, 1], [], []>} : vector<8x32xf32>, vector<32x128xf32>, vector<8x128xf32> -> vector<8x128xf32>
    %328 = arith.addf %326, %327 : vector<8x128xf32>
    %329 = vector.broadcast %11 : vector<1x128xf32> to vector<8x128xf32>
    %330 = arith.addf %328, %329 : vector<8x128xf32>
    %cst_81 = arith.constant 5.000000e-01 : f32
    %331 = vector.broadcast %cst_81 : f32 to vector<8x128xf32>
    %332 = arith.mulf %331, %330 : vector<8x128xf32>
    %333 = arith.select %5, %330, %332 : vector<8x128xi1>, vector<8x128xf32>
    %334 = math.tanh %333 : vector<8x128xf32>
    %cst_82 = arith.constant 5.000000e-01 : f32
    %335 = vector.broadcast %cst_82 : f32 to vector<8x128xf32>
    %336 = arith.mulf %335, %334 : vector<8x128xf32>
    %cst_83 = arith.constant 5.000000e-01 : f32
    %337 = vector.broadcast %cst_83 : f32 to vector<8x128xf32>
    %338 = arith.addf %336, %337 : vector<8x128xf32>
    %339 = arith.select %5, %334, %338 : vector<8x128xi1>, vector<8x128xf32>
    %340 = vector.extract_strided_slice %339 {offsets = [0, 0], sizes = [8, 32], strides = [1, 1]} : vector<8x128xf32> to vector<8x32xf32>
    %341 = vector.extract_strided_slice %339 {offsets = [0, 32], sizes = [8, 32], strides = [1, 1]} : vector<8x128xf32> to vector<8x32xf32>
    %342 = vector.extract_strided_slice %339 {offsets = [0, 64], sizes = [8, 32], strides = [1, 1]} : vector<8x128xf32> to vector<8x32xf32>
    %343 = vector.extract_strided_slice %339 {offsets = [0, 96], sizes = [8, 32], strides = [1, 1]} : vector<8x128xf32> to vector<8x32xf32>
    %344 = arith.mulf %341, %302 : vector<8x32xf32>
    %345 = arith.mulf %340, %342 : vector<8x32xf32>
    %346 = arith.addf %344, %345 : vector<8x32xf32>
    %347 = math.tanh %346 : vector<8x32xf32>
    %348 = arith.mulf %343, %347 : vector<8x32xf32>
    %cst_84 = arith.constant dense<0.000000e+00> : vector<8x128xf32>
    %349 = tpu.matmul %325, %7, %cst_84 {dimension_numbers = #tpu.dot_dimension_numbers<[1], [0], [0], [1], [0, 0, 1, 1], [], []>} : vector<8x32xf32>, vector<32x128xf32>, vector<8x128xf32> -> vector<8x128xf32>
    %cst_85 = arith.constant dense<0.000000e+00> : vector<8x128xf32>
    %350 = tpu.matmul %348, %9, %cst_85 {dimension_numbers = #tpu.dot_dimension_numbers<[1], [0], [0], [1], [0, 0, 1, 1], [], []>} : vector<8x32xf32>, vector<32x128xf32>, vector<8x128xf32> -> vector<8x128xf32>
    %351 = arith.addf %349, %350 : vector<8x128xf32>
    %352 = vector.broadcast %11 : vector<1x128xf32> to vector<8x128xf32>
    %353 = arith.addf %351, %352 : vector<8x128xf32>
    %cst_86 = arith.constant 5.000000e-01 : f32
    %354 = vector.broadcast %cst_86 : f32 to vector<8x128xf32>
    %355 = arith.mulf %354, %353 : vector<8x128xf32>
    %356 = arith.select %5, %353, %355 : vector<8x128xi1>, vector<8x128xf32>
    %357 = math.tanh %356 : vector<8x128xf32>
    %cst_87 = arith.constant 5.000000e-01 : f32
    %358 = vector.broadcast %cst_87 : f32 to vector<8x128xf32>
    %359 = arith.mulf %358, %357 : vector<8x128xf32>
    %cst_88 = arith.constant 5.000000e-01 : f32
    %360 = vector.broadcast %cst_88 : f32 to vector<8x128xf32>
    %361 = arith.addf %359, %360 : vector<8x128xf32>
    %362 = arith.select %5, %357, %361 : vector<8x128xi1>, vector<8x128xf32>
    %363 = vector.extract_strided_slice %362 {offsets = [0, 0], sizes = [8, 32], strides = [1, 1]} : vector<8x128xf32> to vector<8x32xf32>
    %364 = vector.extract_strided_slice %362 {offsets = [0, 32], sizes = [8, 32], strides = [1, 1]} : vector<8x128xf32> to vector<8x32xf32>
    %365 = vector.extract_strided_slice %362 {offsets = [0, 64], sizes = [8, 32], strides = [1, 1]} : vector<8x128xf32> to vector<8x32xf32>
    %366 = vector.extract_strided_slice %362 {offsets = [0, 96], sizes = [8, 32], strides = [1, 1]} : vector<8x128xf32> to vector<8x32xf32>
    %367 = arith.mulf %364, %346 : vector<8x32xf32>
    %368 = arith.mulf %363, %365 : vector<8x32xf32>
    %369 = arith.addf %367, %368 : vector<8x32xf32>
    %370 = math.tanh %369 : vector<8x32xf32>
    %371 = arith.mulf %366, %370 : vector<8x32xf32>
    %cst_89 = arith.constant 0.000000e+00 : f32
    %372 = vector.broadcast %cst_89 : f32 to vector<8x32xf32>
    %373 = arith.maximumf %371, %372 : vector<8x32xf32>
    %c0_90 = arith.constant 0 : index
    %c0_91 = arith.constant 0 : index
    %374 = vector.load %arg7[%c0_90, %c0_91] : memref<32x1xf32, #tpu.memory_space<vmem>>, vector<32x1xf32>
    %cst_92 = arith.constant dense<0.000000e+00> : vector<8x1xf32>
    %375 = tpu.matmul %373, %374, %cst_92 {dimension_numbers = #tpu.dot_dimension_numbers<[1], [0], [0], [1], [0, 0, 1, 1], [], []>} : vector<8x32xf32>, vector<32x1xf32>, vector<8x1xf32> -> vector<8x1xf32>
    %c0_93 = arith.constant 0 : index
    %c0_94 = arith.constant 0 : index
    %376 = vector.load %arg8[%c0_93, %c0_94] : memref<1x1xf32, #tpu.memory_space<vmem>>, vector<1x1xf32>
    %377 = vector.broadcast %376 : vector<1x1xf32> to vector<8x1xf32>
    %378 = arith.addf %375, %377 : vector<8x1xf32>
    %c0_95 = arith.constant 0 : index
    %c0_96 = arith.constant 0 : index
    %379 = vector.load %arg9[%c0_95, %c0_96] : memref<8x1xf32, #tpu.memory_space<vmem>>, vector<8x1xf32>
    tpu.vector_store %arg9[%c0_95, %c0_96], %378 {strides = array<i32>} : memref<8x1xf32, #tpu.memory_space<vmem>>, vector<8x1xf32>,
    return
  }
}

</mosaic_0001>

<llo_original>
// kernel: tpu_custom_call.1
$region0: #{tpu_custom_call.1}
  #allocation0 [shape = 'u32[]', space=smem, size = 0x4, offset = 0x4, fixed_abs, tag = 'smem constant byte address 0x4 - core index']
  #allocation1 [shape = 'u32[144,128]{1,0:T(1,128)}', space=vmem, size = 0x12000, scoped, tag = 'internal scratch']
  #allocation2 [shape = 'f32[1,1]{1,0:T(1,128)S(1)}', space=vmem, size = 0x200, scoped, tag = 'scoped memory for tpu_custom_call.1']
  %s0 = inlined_call_operand.vmem [shape: f32[64,4], index: 0, kind: input, shape index: {}]
  %s1 = inlined_call_operand.vmem [shape: f32[4,128], index: 1, kind: input, shape index: {}]
  %s2 = inlined_call_operand.vmem [shape: f32[32,128], index: 2, kind: input, shape index: {}]
  %s3 = inlined_call_operand.vmem [shape: f32[1,128], index: 3, kind: input, shape index: {}]
  %s4 = inlined_call_operand.vmem [shape: f32[32,128], index: 4, kind: input, shape index: {}]
  %s5 = inlined_call_operand.vmem [shape: f32[32,128], index: 5, kind: input, shape index: {}]
  %s6 = inlined_call_operand.vmem [shape: f32[1,128], index: 6, kind: input, shape index: {}]
  %s7 = inlined_call_operand.vmem [shape: f32[32,1], index: 7, kind: input, shape index: {}]
  %s8 = inlined_call_operand.<no memory space> [shape: f32[1,1], index: 8, kind: input, shape index: {}]
  %s9 = inlined_call_operand.vmem [shape: f32[8,1], index: 9, kind: output, shape index: {}]
  %s10 = sld [smem:[#allocation0]]
  $region46: #{tpu_custom_call.1} parent=0
    _
  %s12 = ssub.s32 1, %s10
  %s13 = scalar_select 0, %s12, %s10
  %v14 = vstv %s8
  %15 = vst [vmem:[#allocation2] sm:$0x1] %v14
  // Predicated region
  $region2: #{tpu_custom_call.1} parent=0 // pred_check
    _
  $region3: #{tpu_custom_call.1} parent=0 // pred_check_branch
    %17 = sbr.rel (0) target = $region5
  $region4: #{tpu_custom_call.1} parent=0 // pred_region
    _
  $region5: #{tpu_custom_call.1} parent=0 // pred_fallthru
    _
  // Predicated region
  $region6: #{tpu_custom_call.1} parent=0 // pred_check
    _
  $region7: #{tpu_custom_call.1} parent=0 // pred_check_branch
    %19 = sbr.rel (0) target = $region9
  $region8: #{tpu_custom_call.1} parent=0 // pred_region
    _
  $region9: #{tpu_custom_call.1} parent=0 // pred_fallthru
    _
  // Predicated region
  $region10: #{tpu_custom_call.1} parent=0 // pred_check
    _
  $region11: #{tpu_custom_call.1} parent=0 // pred_check_branch
    %21 = sbr.rel (0) target = $region13
  $region12: #{tpu_custom_call.1} parent=0 // pred_region
    _
  $region13: #{tpu_custom_call.1} parent=0 // pred_fallthru
    _
  // Predicated region
  $region14: #{tpu_custom_call.1} parent=0 // pred_check
    _
  $region15: #{tpu_custom_call.1} parent=0 // pred_check_branch
    %23 = sbr.rel (0) target = $region17
  $region16: #{tpu_custom_call.1} parent=0 // pred_region
    _
  $region17: #{tpu_custom_call.1} parent=0 // pred_fallthru
    _
  // Predicated region
  $region18: #{tpu_custom_call.1} parent=0 // pred_check
    _
  $region19: #{tpu_custom_call.1} parent=0 // pred_check_branch
    %25 = sbr.rel (0) target = $region21
  $region20: #{tpu_custom_call.1} parent=0 // pred_region
    _
  $region21: #{tpu_custom_call.1} parent=0 // pred_fallthru
    _
  // Predicated region
  $region22: #{tpu_custom_call.1} parent=0 // pred_check
    _
  $region23: #{tpu_custom_call.1} parent=0 // pred_check_branch
    %27 = sbr.rel (0) target = $region25
  $region24: #{tpu_custom_call.1} parent=0 // pred_region
    _
  $region25: #{tpu_custom_call.1} parent=0 // pred_fallthru
    _
  // Predicated region
  $region26: #{tpu_custom_call.1} parent=0 // pred_check
    _
  $region27: #{tpu_custom_call.1} parent=0 // pred_check_branch
    %29 = sbr.rel (0) target = $region29
  $region28: #{tpu_custom_call.1} parent=0 // pred_region
    _
  $region29: #{tpu_custom_call.1} parent=0 // pred_fallthru
    _
  // Predicated region
  $region30: #{tpu_custom_call.1} parent=0 // pred_check
    _
  $region31: #{tpu_custom_call.1} parent=0 // pred_check_branch
    %31 = sbr.rel (0) target = $region33
  $region32: #{tpu_custom_call.1} parent=0 // pred_region
    _
  $region33: #{tpu_custom_call.1} parent=0 // pred_fallthru
    _
  // Predicated region
  $region34: #{tpu_custom_call.1} parent=0 // pred_check
    _
  $region35: #{tpu_custom_call.1} parent=0 // pred_check_branch
    %33 = sbr.rel (0) target = $region37
  $region36: #{tpu_custom_call.1} parent=0 // pred_region
    _
  $region37: #{tpu_custom_call.1} parent=0 // pred_fallthru
    _
  %v34 = vlaneseq
  %v35 = vand.u32 %v34, 127
  %vm36 = vcmp.ge.s32.totalorder %v35, 64
  %vm37 = vcmp.lt.s32.totalorder %v35, 96
  %vm38 = vmand %vm36, %vm37
  %v39 = vld [vmem:[%s1] sm:$0xf]
  %v40 = vld [vmem:[%s4] sm:$0xff]
  %v41 = vld [vmem:[%s4 + $0x8] sm:$0xff]
  %v42 = vld [vmem:[%s4 + $0x10] sm:$0xff]
  %v43 = vld [vmem:[%s4 + $0x18] sm:$0xff]
  %v44 = vld [vmem:[%s2] sm:$0xff]
  %v45 = vld [vmem:[%s2 + $0x8] sm:$0xff]
  %v46 = vld [vmem:[%s2 + $0x10] sm:$0xff]
  %v47 = vld [vmem:[%s2 + $0x18] sm:$0xff]
  %v48 = vld [vmem:[%s5] sm:$0xff]
  %v49 = vld [vmem:[%s5 + $0x8] sm:$0xff]
  %v50 = vld [vmem:[%s5 + $0x10] sm:$0xff]
  %v51 = vld [vmem:[%s5 + $0x18] sm:$0xff]
  %v52 = vld [vmem:[%s3] sm:$0x1]
  %v53 = vld [vmem:[%s6] sm:$0x1]
  %v54 = vld [vmem:[%s0] sm:$0xff]
  %v55 = vld [vmem:[%s0 + $0x8] sm:$0xff]
  %v56 = vld [vmem:[%s0 + $0x10] sm:$0xff]
  %v57 = vld [vmem:[%s0 + $0x18] sm:$0xff]
  %v58 = vld [vmem:[%s0 + $0x20] sm:$0xff]
  %v59 = vld [vmem:[%s0 + $0x28] sm:$0xff]
  %v60 = vld [vmem:[%s0 + $0x30] sm:$0xff]
  %v61 = vld [vmem:[%s0 + $0x38] sm:$0xff]
  %v63 = vlaneseq
  %v64 = vshrl.u32 %v63, 7
  %v65 = vsub.s32 0, %v64
  %v66 = vrot.slane %v52, %v65
  %vm68 = vcmask 31744
  %v70 = vsel %vm68, %v54, 0
  %v73 = vsel %vm68, %v55, 0
  %v76 = vsel %vm68, %v56, 0
  %v79 = vsel %vm68, %v57, 0
  %v82 = vsel %vm68, %v58, 0
  %v85 = vsel %vm68, %v59, 0
  %v88 = vsel %vm68, %v60, 0
  %v91 = vsel %vm68, %v61, 0
  %vm93 = vcmask 1043456
  %v95 = vsel %vm93, %v39, 0
  %97 = vmatprep.subr.mxu0 0.0
  %98 = vmatpush1.msra.mxu0 %v95
  %99 = vmatprep.subr.mxu0 0.0
  %100 = vmatpush1.msra.mxu0 0.0
  %101 = vmatprep.subr.mxu0 0.0
  %102 = vmatpush1.msra.mxu0 0.0
  %103 = vmatprep.subr.mxu0 0.0
  %104 = vmatpush1.msra.mxu0 0.0
  %105 = vmatprep.subr.mxu0 0.0
  %106 = vmatpush1.msra.mxu0 0.0
  %107 = vmatprep.subr.mxu0 0.0
  %108 = vmatpush1.msra.mxu0 0.0
  %109 = vmatprep.subr.mxu0 0.0
  %110 = vmatpush1.msra.mxu0 0.0
  %111 = vmatprep.subr.mxu0 0.0
  %112 = vmatpush1.msra.mxu0 0.0
  %113 = vmatprep.subr.mxu0 0.0
  %114 = vmatpush1.msra.mxu0 0.0
  %115 = vmatprep.subr.mxu0 0.0
  %116 = vmatpush1.msra.mxu0 0.0
  %117 = vmatprep.subr.mxu0 0.0
  %118 = vmatpush1.msra.mxu0 0.0
  %119 = vmatprep.subr.mxu0 0.0
  %120 = vmatpush1.msra.mxu0 0.0
  %121 = vmatprep.subr.mxu0 0.0
  %122 = vmatpush1.msra.mxu0 0.0
  %123 = vmatprep.subr.mxu0 0.0
  %124 = vmatpush1.msra.mxu0 0.0
  %125 = vmatprep.subr.mxu0 0.0
  %126 = vmatpush1.msra.mxu0 0.0
  %127 = vmatprep.subr.mxu0 0.0
  %128 = vmatpush1.msra.mxu0 0.0
  %129 = vmatprep.subr.mxu0 0.0
  %130 = vmatpush1.msra.mxu0 0.0
  %131 = vmatprep.subr.mxu0 0.0
  %132 = vmatpush1.msra.mxu0 0.0
  %133 = vmatprep.subr.mxu0 0.0
  %134 = vmatpush1.msra.mxu0 0.0
  %135 = vmatprep.subr.mxu0 0.0
  %136 = vmatpush1.msra.mxu0 0.0
  %137 = vmatprep.subr.mxu0 0.0
  %138 = vmatpush1.msra.mxu0 0.0
  %139 = vmatprep.subr.mxu0 0.0
  %140 = vmatpush1.msra.mxu0 0.0
  %141 = vmatprep.subr.mxu0 0.0
  %142 = vmatpush1.msra.mxu0 0.0
  %143 = vmatprep.subr.mxu0 0.0
  %144 = vmatpush1.msra.mxu0 0.0
  %145 = vmatprep.subr.mxu0 0.0
  %146 = vmatpush1.msra.mxu0 0.0
  %147 = vmatprep.subr.mxu0 0.0
  %148 = vmatpush1.msra.mxu0 0.0
  %149 = vmatprep.subr.mxu0 0.0
  %150 = vmatpush1.msra.mxu0 0.0
  %151 = vmatprep.subr.mxu0 0.0
  %152 = vmatpush1.msra.mxu0 0.0
  %153 = vmatprep.subr.mxu0 0.0
  %154 = vmatpush1.msra.mxu0 0.0
  %155 = vmatprep.subr.mxu0 0.0
  %156 = vmatpush1.msra.mxu0 0.0
  %157 = vmatprep.subr.mxu0 0.0
  %158 = vmatpush1.msra.mxu0 0.0
  %159 = vmatprep.subr.mxu0 0.0
  %160 = vmatpush1.msra.mxu0 0.0
  %161 = vmatprep.mubr.f32.mxu0 0.0
  %162 = vmatmul.mubr.f32.gmra.mrb[0].mxu0 %v70
  %v163 = vpop.f32.mrb[0].mxu0
  %v164 = vadd.f32 %v66, %v163
  %v165 = vpop.f32.mrb[0].mxu0
  %166 = vmatprep.mubr.f32.mxu0 0.0
  %167 = vmatmul.mubr.f32.gmra.mrb[0].mxu0 %v73
  %v168 = vpop.f32.mrb[0].mxu0
  %v169 = vadd.f32 %v66, %v168
  %v170 = vpop.f32.mrb[0].mxu0
  %171 = vmatprep.mubr.f32.mxu0 0.0
  %172 = vmatmul.mubr.f32.gmra.mrb[0].mxu0 %v76
  %v173 = vpop.f32.mrb[0].mxu0
  %v174 = vadd.f32 %v66, %v173
  %v175 = vpop.f32.mrb[0].mxu0
  %176 = vmatprep.mubr.f32.mxu0 0.0
  %177 = vmatmul.mubr.f32.gmra.mrb[0].mxu0 %v79
  %v178 = vpop.f32.mrb[0].mxu0
  %v179 = vadd.f32 %v66, %v178
  %v180 = vpop.f32.mrb[0].mxu0
  %181 = vmatprep.mubr.f32.mxu0 0.0
  %182 = vmatmul.mubr.f32.gmra.mrb[0].mxu0 %v82
  %v183 = vpop.f32.mrb[0].mxu0
  %v184 = vadd.f32 %v66, %v183
  %v185 = vpop.f32.mrb[0].mxu0
  %186 = vmatprep.mubr.f32.mxu0 0.0
  %187 = vmatmul.mubr.f32.gmra.mrb[0].mxu0 %v85
  %v188 = vpop.f32.mrb[0].mxu0
  %v189 = vadd.f32 %v66, %v188
  %v190 = vpop.f32.mrb[0].mxu0
  %191 = vmatprep.mubr.f32.mxu0 0.0
  %192 = vmatmul.mubr.f32.gmra.mrb[0].mxu0 %v88
  %v193 = vpop.f32.mrb[0].mxu0
  %v194 = vadd.f32 %v66, %v193
  %v195 = vpop.f32.mrb[0].mxu0
  %196 = vmatprep.mubr.f32.mxu0 0.0
  %197 = vmatmul.mubr.f32.gmra.mrb[0].mxu0 %v91
  %v198 = vpop.f32.mrb[0].mxu0
  %v199 = vadd.f32 %v66, %v198
  %v200 = vpop.f32.mrb[0].mxu0
  %201 = vdwg.mxu0
  %vm202 = vcmask 261120
  %v204 = vsel %vm202, 0.0, 0
  %206 = vmatprep.subr.mxu0 0.0
  %207 = vmatpush1.msra.mxu0 %v44
  %208 = vmatprep.subr.mxu0 0.0
  %209 = vmatpush1.msra.mxu0 %v45
  %210 = vmatprep.subr.mxu0 0.0
  %211 = vmatpush1.msra.mxu0 %v46
  %212 = vmatprep.subr.mxu0 0.0
  %213 = vmatpush1.msra.mxu0 %v47
  %214 = vmatprep.subr.mxu0 0.0
  %215 = vmatpush1.msra.mxu0 0.0
  %216 = vmatprep.subr.mxu0 0.0
  %217 = vmatpush1.msra.mxu0 0.0
  %218 = vmatprep.subr.mxu0 0.0
  %219 = vmatpush1.msra.mxu0 0.0
  %220 = vmatprep.subr.mxu0 0.0
  %221 = vmatpush1.msra.mxu0 0.0
  %222 = vmatprep.subr.mxu0 0.0
  %223 = vmatpush1.msra.mxu0 0.0
  %224 = vmatprep.subr.mxu0 0.0
  %225 = vmatpush1.msra.mxu0 0.0
  %226 = vmatprep.subr.mxu0 0.0
  %227 = vmatpush1.msra.mxu0 0.0
  %228 = vmatprep.subr.mxu0 0.0
  %229 = vmatpush1.msra.mxu0 0.0
  %230 = vmatprep.subr.mxu0 0.0
  %231 = vmatpush1.msra.mxu0 0.0
  %232 = vmatprep.subr.mxu0 0.0
  %233 = vmatpush1.msra.mxu0 0.0
  %234 = vmatprep.subr.mxu0 0.0
  %235 = vmatpush1.msra.mxu0 0.0
  %236 = vmatprep.subr.mxu0 0.0
  %237 = vmatpush1.msra.mxu0 0.0
  %238 = vmatprep.subr.mxu0 0.0
  %239 = vmatpush1.msra.mxu0 0.0
  %240 = vmatprep.subr.mxu0 0.0
  %241 = vmatpush1.msra.mxu0 0.0
  %242 = vmatprep.subr.mxu0 0.0
  %243 = vmatpush1.msra.mxu0 0.0
  %244 = vmatprep.subr.mxu0 0.0
  %245 = vmatpush1.msra.mxu0 0.0
  %246 = vmatprep.subr.mxu0 0.0
  %247 = vmatpush1.msra.mxu0 0.0
  %248 = vmatprep.subr.mxu0 0.0
  %249 = vmatpush1.msra.mxu0 0.0
  %250 = vmatprep.subr.mxu0 0.0
  %251 = vmatpush1.msra.mxu0 0.0
  %252 = vmatprep.subr.mxu0 0.0
  %253 = vmatpush1.msra.mxu0 0.0
  %254 = vmatprep.subr.mxu0 0.0
  %255 = vmatpush1.msra.mxu0 0.0
  %256 = vmatprep.subr.mxu0 0.0
  %257 = vmatpush1.msra.mxu0 0.0
  %258 = vmatprep.subr.mxu0 0.0
  %259 = vmatpush1.msra.mxu0 0.0
  %260 = vmatprep.subr.mxu0 0.0
  %261 = vmatpush1.msra.mxu0 0.0
  %262 = vmatprep.subr.mxu0 0.0
  %263 = vmatpush1.msra.mxu0 0.0
  %264 = vmatprep.subr.mxu0 0.0
  %265 = vmatpush1.msra.mxu0 0.0
  %266 = vmatprep.subr.mxu0 0.0
  %267 = vmatpush1.msra.mxu0 0.0
  %268 = vmatprep.subr.mxu0 0.0
  %269 = vmatpush1.msra.mxu0 0.0
  %270 = vmatprep.mubr.f32.mxu0 0.0
  %271 = vmatmul.mubr.f32.gmra.mrb[0].mxu0 %v204
  %v272 = vpop.f32.mrb[0].mxu0
  %v273 = vadd.f32 0.0, %v272
  %v274 = vpop.f32.mrb[0].mxu0
  %275 = vdwg.mxu0
  %v276 = vadd.f32 %v164, %v273
  %v277 = vmul.f32 %v276, 0.5
  %v278 = vsel %vm38, %v276, %v277
  %v279 = vtanh.pop %v278
  %v280 = vmul.f32 %v279, 0.5
  %v281 = vadd.f32 %v280, 0.5
  %v282 = vsel %vm38, %v279, %v281
  %v283 = vmul.f32 %v282, 0.0
  %285 = vrot.lane.b32.xlu0 %v282, 64
  %v286 = vpop.permute.xlu0 %285
  %v288 = vmul.f32 %v282, %v286
  %290 = vrot.lane.b32.xlu0 %v288, 32
  %v291 = vpop.permute.xlu0 %290
  %v293 = vadd.f32 %v283, %v291
  %v294 = vtanh.pop %v293
  %296 = vrot.lane.b32.xlu0 %v294, 64
  %v297 = vpop.permute.xlu0 %296
  %v299 = vmul.f32 %v282, %v297
  %301 = vrot.lane.b32.xlu0 %v299, 32
  %v302 = vpop.permute.xlu0 %301
  %v303 = vsel %vm202, %v302, 0
  %305 = vmatprep.subr.mxu0 0.0
  %306 = vmatpush1.msra.mxu0 %v44
  %307 = vmatprep.subr.mxu0 0.0
  %308 = vmatpush1.msra.mxu0 %v45
  %309 = vmatprep.subr.mxu0 0.0
  %310 = vmatpush1.msra.mxu0 %v46
  %311 = vmatprep.subr.mxu0 0.0
  %312 = vmatpush1.msra.mxu0 %v47
  %313 = vmatprep.subr.mxu0 0.0
  %314 = vmatpush1.msra.mxu0 0.0
  %315 = vmatprep.subr.mxu0 0.0
  %316 = vmatpush1.msra.mxu0 0.0
  %317 = vmatprep.subr.mxu0 0.0
  %318 = vmatpush1.msra.mxu0 0.0
  %319 = vmatprep.subr.mxu0 0.0
  %320 = vmatpush1.msra.mxu0 0.0
  %321 = vmatprep.subr.mxu0 0.0
  %322 = vmatpush1.msra.mxu0 0.0
  %323 = vmatprep.subr.mxu0 0.0
  %324 = vmatpush1.msra.mxu0 0.0
  %325 = vmatprep.subr.mxu0 0.0
  %326 = vmatpush1.msra.mxu0 0.0
  %327 = vmatprep.subr.mxu0 0.0
  %328 = vmatpush1.msra.mxu0 0.0
  %329 = vmatprep.subr.mxu0 0.0
  %330 = vmatpush1.msra.mxu0 0.0
  %331 = vmatprep.subr.mxu0 0.0
  %332 = vmatpush1.msra.mxu0 0.0
  %333 = vmatprep.subr.mxu0 0.0
  %334 = vmatpush1.msra.mxu0 0.0
  %335 = vmatprep.subr.mxu0 0.0
  %336 = vmatpush1.msra.mxu0 0.0
  %337 = vmatprep.subr.mxu0 0.0
  %338 = vmatpush1.msra.mxu0 0.0
  %339 = vmatprep.subr.mxu0 0.0
  %340 = vmatpush1.msra.mxu0 0.0
  %341 = vmatprep.subr.mxu0 0.0
  %342 = vmatpush1.msra.mxu0 0.0
  %343 = vmatprep.subr.mxu0 0.0
  %344 = vmatpush1.msra.mxu0 0.0
  %345 = vmatprep.subr.mxu0 0.0
  %346 = vmatpush1.msra.mxu0 0.0
  %347 = vmatprep.subr.mxu0 0.0
  %348 = vmatpush1.msra.mxu0 0.0
  %349 = vmatprep.subr.mxu0 0.0
  %350 = vmatpush1.msra.mxu0 0.0
  %351 = vmatprep.subr.mxu0 0.0
  %352 = vmatpush1.msra.mxu0 0.0
  %353 = vmatprep.subr.mxu0 0.0
  %354 = vmatpush1.msra.mxu0 0.0
  %355 = vmatprep.subr.mxu0 0.0
  %356 = vmatpush1.msra.mxu0 0.0
  %357 = vmatprep.subr.mxu0 0.0
  %358 = vmatpush1.msra.mxu0 0.0
  %359 = vmatprep.subr.mxu0 0.0
  %360 = vmatpush1.msra.mxu0 0.0
  %361 = vmatprep.subr.mxu0 0.0
  %362 = vmatpush1.msra.mxu0 0.0
  %363 = vmatprep.subr.mxu0 0.0
  %364 = vmatpush1.msra.mxu0 0.0
  %365 = vmatprep.subr.mxu0 0.0
  %366 = vmatpush1.msra.mxu0 0.0
  %367 = vmatprep.subr.mxu0 0.0
  %368 = vmatpush1.msra.mxu0 0.0
  %369 = vmatprep.mubr.f32.mxu0 0.0
  %370 = vmatmul.mubr.f32.gmra.mrb[0].mxu0 %v303
  %v371 = vpop.f32.mrb[0].mxu0
  %v372 = vadd.f32 0.0, %v371
  %v373 = vpop.f32.mrb[0].mxu0
  %374 = vdwg.mxu0
  %v375 = vadd.f32 %v169, %v372
  %v376 = vmul.f32 %v375, 0.5
  %v377 = vsel %vm38, %v375, %v376
  %v378 = vtanh.pop %v377
  %v379 = vmul.f32 %v378, 0.5
  %v380 = vadd.f32 %v379, 0.5
  %v381 = vsel %vm38, %v378, %v380
  %v382 = vmul.f32 %v381, %v293
  %384 = vrot.lane.b32.xlu0 %v381, 64
  %v385 = vpop.permute.xlu0 %384
  %v387 = vmul.f32 %v381, %v385
  %389 = vrot.lane.b32.xlu0 %v387, 32
  %v390 = vpop.permute.xlu0 %389
  %v392 = vadd.f32 %v382, %v390
  %v393 = vtanh.pop %v392
  %395 = vrot.lane.b32.xlu0 %v393, 64
  %v396 = vpop.permute.xlu0 %395
  %v398 = vmul.f32 %v381, %v396
  %399 = vmatprep.subr.mxu0 0.0
  %400 = vmatpush1.msra.mxu0 %v48
  %401 = vmatprep.subr.mxu0 0.0
  %402 = vmatpush1.msra.mxu0 %v49
  %403 = vmatprep.subr.mxu0 0.0
  %404 = vmatpush1.msra.mxu0 %v50
  %405 = vmatprep.subr.mxu0 0.0
  %406 = vmatpush1.msra.mxu0 %v51
  %407 = vmatprep.subr.mxu0 0.0
  %408 = vmatpush1.msra.mxu0 0.0
  %409 = vmatprep.subr.mxu0 0.0
  %410 = vmatpush1.msra.mxu0 0.0
  %411 = vmatprep.subr.mxu0 0.0
  %412 = vmatpush1.msra.mxu0 0.0
  %413 = vmatprep.subr.mxu0 0.0
  %414 = vmatpush1.msra.mxu0 0.0
  %415 = vmatprep.subr.mxu0 0.0
  %416 = vmatpush1.msra.mxu0 0.0
  %417 = vmatprep.subr.mxu0 0.0
  %418 = vmatpush1.msra.mxu0 0.0
  %419 = vmatprep.subr.mxu0 0.0
  %420 = vmatpush1.msra.mxu0 0.0
  %421 = vmatprep.subr.mxu0 0.0
  %422 = vmatpush1.msra.mxu0 0.0
  %423 = vmatprep.subr.mxu0 0.0
  %424 = vmatpush1.msra.mxu0 0.0
  %425 = vmatprep.subr.mxu0 0.0
  %426 = vmatpush1.msra.mxu0 0.0
  %427 = vmatprep.subr.mxu0 0.0
  %428 = vmatpush1.msra.mxu0 0.0
  %429 = vmatprep.subr.mxu0 0.0
  %430 = vmatpush1.msra.mxu0 0.0
  %431 = vmatprep.subr.mxu0 0.0
  %432 = vmatpush1.msra.mxu0 0.0
  %433 = vmatprep.subr.mxu0 0.0
  %434 = vmatpush1.msra.mxu0 0.0
  %435 = vmatprep.subr.mxu0 0.0
  %436 = vmatpush1.msra.mxu0 0.0
  %437 = vmatprep.subr.mxu0 0.0
  %438 = vmatpush1.msra.mxu0 0.0
  %439 = vmatprep.subr.mxu0 0.0
  %440 = vmatpush1.msra.mxu0 0.0
  %441 = vmatprep.subr.mxu0 0.0
  %442 = vmatpush1.msra.mxu0 0.0
  %443 = vmatprep.subr.mxu0 0.0
  %444 = vmatpush1.msra.mxu0 0.0
  %445 = vmatprep.subr.mxu0 0.0
  %446 = vmatpush1.msra.mxu0 0.0
  %447 = vmatprep.subr.mxu0 0.0
  %448 = vmatpush1.msra.mxu0 0.0
  %449 = vmatprep.subr.mxu0 0.0
  %450 = vmatpush1.msra.mxu0 0.0
  %451 = vmatprep.subr.mxu0 0.0
  %452 = vmatpush1.msra.mxu0 0.0
  %453 = vmatprep.subr.mxu0 0.0
  %454 = vmatpush1.msra.mxu0 0.0
  %455 = vmatprep.subr.mxu0 0.0
  %456 = vmatpush1.msra.mxu0 0.0
  %457 = vmatprep.subr.mxu0 0.0
  %458 = vmatpush1.msra.mxu0 0.0
  %459 = vmatprep.subr.mxu0 0.0
  %460 = vmatpush1.msra.mxu0 0.0
  %461 = vmatprep.subr.mxu0 0.0
  %462 = vmatpush1.msra.mxu0 0.0
  %463 = vmatprep.mubr.f32.mxu0 0.0
  %464 = vmatmul.mubr.f32.gmra.mrb[0].mxu0 %v204
  %v465 = vpop.f32.mrb[0].mxu0
  %v466 = vadd.f32 0.0, %v465
  %v467 = vpop.f32.mrb[0].mxu0
  %468 = vdwg.mxu0
  %469 = vmatprep.subr.mxu0 0.0
  %470 = vmatpush1.msra.mxu0 %v40
  %471 = vmatprep.subr.mxu0 0.0
  %472 = vmatpush1.msra.mxu0 %v41
  %473 = vmatprep.subr.mxu0 0.0
  %474 = vmatpush1.msra.mxu0 %v42
  %475 = vmatprep.subr.mxu0 0.0
  %476 = vmatpush1.msra.mxu0 %v43
  %477 = vmatprep.subr.mxu0 0.0
  %478 = vmatpush1.msra.mxu0 0.0
  %479 = vmatprep.subr.mxu0 0.0
  %480 = vmatpush1.msra.mxu0 0.0
  %481 = vmatprep.subr.mxu0 0.0
  %482 = vmatpush1.msra.mxu0 0.0
  %483 = vmatprep.subr.mxu0 0.0
  %484 = vmatpush1.msra.mxu0 0.0
  %485 = vmatprep.subr.mxu0 0.0
  %486 = vmatpush1.msra.mxu0 0.0
  %487 = vmatprep.subr.mxu0 0.0
  %488 = vmatpush1.msra.mxu0 0.0
  %489 = vmatprep.subr.mxu0 0.0
  %490 = vmatpush1.msra.mxu0 0.0
  %491 = vmatprep.subr.mxu0 0.0
  %492 = vmatpush1.msra.mxu0 0.0
  %493 = vmatprep.subr.mxu0 0.0
  %494 = vmatpush1.msra.mxu0 0.0
  %495 = vmatprep.subr.mxu0 0.0
  %496 = vmatpush1.msra.mxu0 0.0
  %497 = vmatprep.subr.mxu0 0.0
  %498 = vmatpush1.msra.mxu0 0.0
  %499 = vmatprep.subr.mxu0 0.0
  %500 = vmatpush1.msra.mxu0 0.0
  %501 = vmatprep.subr.mxu0 0.0
  %502 = vmatpush1.msra.mxu0 0.0
  %503 = vmatprep.subr.mxu0 0.0
  %504 = vmatpush1.msra.mxu0 0.0
  %505 = vmatprep.subr.mxu0 0.0
  %506 = vmatpush1.msra.mxu0 0.0
  %507 = vmatprep.subr.mxu0 0.0
  %508 = vmatpush1.msra.mxu0 0.0
  %509 = vmatprep.subr.mxu0 0.0
  %510 = vmatpush1.msra.mxu0 0.0
  %511 = vmatprep.subr.mxu0 0.0
  %512 = vmatpush1.msra.mxu0 0.0
  %513 = vmatprep.subr.mxu0 0.0
  %514 = vmatpush1.msra.mxu0 0.0
  %515 = vmatprep.subr.mxu0 0.0
  %516 = vmatpush1.msra.mxu0 0.0
  %517 = vmatprep.subr.mxu0 0.0
  %518 = vmatpush1.msra.mxu0 0.0
  %519 = vmatprep.subr.mxu0 0.0
  %520 = vmatpush1.msra.mxu0 0.0
  %521 = vmatprep.subr.mxu0 0.0
  %522 = vmatpush1.msra.mxu0 0.0
  %523 = vmatprep.subr.mxu0 0.0
  %524 = vmatpush1.msra.mxu0 0.0
  %525 = vmatprep.subr.mxu0 0.0
  %526 = vmatpush1.msra.mxu0 0.0
  %527 = vmatprep.subr.mxu0 0.0
  %528 = vmatpush1.msra.mxu0 0.0
  %529 = vmatprep.subr.mxu0 0.0
  %530 = vmatpush1.msra.mxu0 0.0
  %531 = vmatprep.subr.mxu0 0.0
  %532 = vmatpush1.msra.mxu0 0.0
  %533 = vmatprep.mubr.f32.mxu0 0.0
  %534 = vmatmul.mubr.f32.gmra.mrb[0].mxu0 %v303
  %v535 = vpop.f32.mrb[0].mxu0
  %v536 = vadd.f32 %v466, %v535
  %v537 = vpop.f32.mrb[0].mxu0
  %538 = vdwg.mxu0
  %v540 = vlaneseq
  %v541 = vshrl.u32 %v540, 7
  %v542 = vsub.s32 0, %v541
  %v543 = vrot.slane %v53, %v542
  %v545 = vadd.f32 %v536, %v543
  %v546 = vmul.f32 %v545, 0.5
  %v547 = vsel %vm38, %v545, %v546
  %v548 = vtanh.pop %v547
  %v549 = vmul.f32 %v548, 0.5
  %v550 = vadd.f32 %v549, 0.5
  %v551 = vsel %vm38, %v548, %v550
  %v552 = vmul.f32 %v551, 0.0
  %554 = vrot.lane.b32.xlu0 %v551, 64
  %v555 = vpop.permute.xlu0 %554
  %v557 = vmul.f32 %v551, %v555
  %559 = vrot.lane.b32.xlu0 %v557, 32
  %v560 = vpop.permute.xlu0 %559
  %v562 = vadd.f32 %v552, %v560
  %v563 = vtanh.pop %v562
  %565 = vrot.lane.b32.xlu0 %v563, 64
  %v566 = vpop.permute.xlu0 %565
  %v568 = vmul.f32 %v551, %v566
  %570 = vrot.lane.b32.xlu0 %v398, 32
  %v571 = vpop.permute.xlu0 %570
  %v572 = vsel %vm202, %v571, 0
  %574 = vmatprep.subr.mxu0 0.0
  %575 = vmatpush1.msra.mxu0 %v44
  %576 = vmatprep.subr.mxu0 0.0
  %577 = vmatpush1.msra.mxu0 %v45
  %578 = vmatprep.subr.mxu0 0.0
  %579 = vmatpush1.msra.mxu0 %v46
  %580 = vmatprep.subr.mxu0 0.0
  %581 = vmatpush1.msra.mxu0 %v47
  %582 = vmatprep.subr.mxu0 0.0
  %583 = vmatpush1.msra.mxu0 0.0
  %584 = vmatprep.subr.mxu0 0.0
  %585 = vmatpush1.msra.mxu0 0.0
  %586 = vmatprep.subr.mxu0 0.0
  %587 = vmatpush1.msra.mxu0 0.0
  %588 = vmatprep.subr.mxu0 0.0
  %589 = vmatpush1.msra.mxu0 0.0
  %590 = vmatprep.subr.mxu0 0.0
  %591 = vmatpush1.msra.mxu0 0.0
  %592 = vmatprep.subr.mxu0 0.0
  %593 = vmatpush1.msra.mxu0 0.0
  %594 = vmatprep.subr.mxu0 0.0
  %595 = vmatpush1.msra.mxu0 0.0
  %596 = vmatprep.subr.mxu0 0.0
  %597 = vmatpush1.msra.mxu0 0.0
  %598 = vmatprep.subr.mxu0 0.0
  %599 = vmatpush1.msra.mxu0 0.0
  %600 = vmatprep.subr.mxu0 0.0
  %601 = vmatpush1.msra.mxu0 0.0
  %602 = vmatprep.subr.mxu0 0.0
  %603 = vmatpush1.msra.mxu0 0.0
  %604 = vmatprep.subr.mxu0 0.0
  %605 = vmatpush1.msra.mxu0 0.0
  %606 = vmatprep.subr.mxu0 0.0
  %607 = vmatpush1.msra.mxu0 0.0
  %608 = vmatprep.subr.mxu0 0.0
  %609 = vmatpush1.msra.mxu0 0.0
  %610 = vmatprep.subr.mxu0 0.0
  %611 = vmatpush1.msra.mxu0 0.0
  %612 = vmatprep.subr.mxu0 0.0
  %613 = vmatpush1.msra.mxu0 0.0
  %614 = vmatprep.subr.mxu0 0.0
  %615 = vmatpush1.msra.mxu0 0.0
  %616 = vmatprep.subr.mxu0 0.0
  %617 = vmatpush1.msra.mxu0 0.0
  %618 = vmatprep.subr.mxu0 0.0
  %619 = vmatpush1.msra.mxu0 0.0
  %620 = vmatprep.subr.mxu0 0.0
  %621 = vmatpush1.msra.mxu0 0.0
  %622 = vmatprep.subr.mxu0 0.0
  %623 = vmatpush1.msra.mxu0 0.0
  %624 = vmatprep.subr.mxu0 0.0
  %625 = vmatpush1.msra.mxu0 0.0
  %626 = vmatprep.subr.mxu0 0.0
  %627 = vmatpush1.msra.mxu0 0.0
  %628 = vmatprep.subr.mxu0 0.0
  %629 = vmatpush1.msra.mxu0 0.0
  %630 = vmatprep.subr.mxu0 0.0
  %631 = vmatpush1.msra.mxu0 0.0
  %632 = vmatprep.subr.mxu0 0.0
  %633 = vmatpush1.msra.mxu0 0.0
  %634 = vmatprep.subr.mxu0 0.0
  %635 = vmatpush1.msra.mxu0 0.0
  %636 = vmatprep.subr.mxu0 0.0
  %637 = vmatpush1.msra.mxu0 0.0
  %638 = vmatprep.mubr.f32.mxu0 0.0
  %639 = vmatmul.mubr.f32.gmra.mrb[0].mxu0 %v572
  %v640 = vpop.f32.mrb[0].mxu0
  %v641 = vadd.f32 0.0, %v640
  %v642 = vpop.f32.mrb[0].mxu0
  %643 = vdwg.mxu0
  %v644 = vadd.f32 %v174, %v641
  %v645 = vmul.f32 %v644, 0.5
  %v646 = vsel %vm38, %v644, %v645
  %v647 = vtanh.pop %v646
  %v648 = vmul.f32 %v647, 0.5
  %v649 = vadd.f32 %v648, 0.5
  %v650 = vsel %vm38, %v647, %v649
  %v651 = vmul.f32 %v650, %v392
  %653 = vrot.lane.b32.xlu0 %v650, 64
  %v654 = vpop.permute.xlu0 %653
  %v656 = vmul.f32 %v650, %v654
  %658 = vrot.lane.b32.xlu0 %v656, 32
  %v659 = vpop.permute.xlu0 %658
  %v661 = vadd.f32 %v651, %v659
  %v662 = vtanh.pop %v661
  %664 = vrot.lane.b32.xlu0 %v662, 64
  %v665 = vpop.permute.xlu0 %664
  %v667 = vmul.f32 %v650, %v665
  %669 = vrot.lane.b32.xlu0 %v568, 32
  %v670 = vpop.permute.xlu0 %669
  %v671 = vsel %vm202, %v670, 0
  %673 = vmatprep.subr.mxu0 0.0
  %674 = vmatpush1.msra.mxu0 %v48
  %675 = vmatprep.subr.mxu0 0.0
  %676 = vmatpush1.msra.mxu0 %v49
  %677 = vmatprep.subr.mxu0 0.0
  %678 = vmatpush1.msra.mxu0 %v50
  %679 = vmatprep.subr.mxu0 0.0
  %680 = vmatpush1.msra.mxu0 %v51
  %681 = vmatprep.subr.mxu0 0.0
  %682 = vmatpush1.msra.mxu0 0.0
  %683 = vmatprep.subr.mxu0 0.0
  %684 = vmatpush1.msra.mxu0 0.0
  %685 = vmatprep.subr.mxu0 0.0
  %686 = vmatpush1.msra.mxu0 0.0
  %687 = vmatprep.subr.mxu0 0.0
  %688 = vmatpush1.msra.mxu0 0.0
  %689 = vmatprep.subr.mxu0 0.0
  %690 = vmatpush1.msra.mxu0 0.0
  %691 = vmatprep.subr.mxu0 0.0
  %692 = vmatpush1.msra.mxu0 0.0
  %693 = vmatprep.subr.mxu0 0.0
  %694 = vmatpush1.msra.mxu0 0.0
  %695 = vmatprep.subr.mxu0 0.0
  %696 = vmatpush1.msra.mxu0 0.0
  %697 = vmatprep.subr.mxu0 0.0
  %698 = vmatpush1.msra.mxu0 0.0
  %699 = vmatprep.subr.mxu0 0.0
  %700 = vmatpush1.msra.mxu0 0.0
  %701 = vmatprep.subr.mxu0 0.0
  %702 = vmatpush1.msra.mxu0 0.0
  %703 = vmatprep.subr.mxu0 0.0
  %704 = vmatpush1.msra.mxu0 0.0
  %705 = vmatprep.subr.mxu0 0.0
  %706 = vmatpush1.msra.mxu0 0.0
  %707 = vmatprep.subr.mxu0 0.0
  %708 = vmatpush1.msra.mxu0 0.0
  %709 = vmatprep.subr.mxu0 0.0
  %710 = vmatpush1.msra.mxu0 0.0
  %711 = vmatprep.subr.mxu0 0.0
  %712 = vmatpush1.msra.mxu0 0.0
  %713 = vmatprep.subr.mxu0 0.0
  %714 = vmatpush1.msra.mxu0 0.0
  %715 = vmatprep.subr.mxu0 0.0
  %716 = vmatpush1.msra.mxu0 0.0
  %717 = vmatprep.subr.mxu0 0.0
  %718 = vmatpush1.msra.mxu0 0.0
  %719 = vmatprep.subr.mxu0 0.0
  %720 = vmatpush1.msra.mxu0 0.0
  %721 = vmatprep.subr.mxu0 0.0
  %722 = vmatpush1.msra.mxu0 0.0
  %723 = vmatprep.subr.mxu0 0.0
  %724 = vmatpush1.msra.mxu0 0.0
  %725 = vmatprep.subr.mxu0 0.0
  %726 = vmatpush1.msra.mxu0 0.0
  %727 = vmatprep.subr.mxu0 0.0
  %728 = vmatpush1.msra.mxu0 0.0
  %729 = vmatprep.subr.mxu0 0.0
  %730 = vmatpush1.msra.mxu0 0.0
  %731 = vmatprep.subr.mxu0 0.0
  %732 = vmatpush1.msra.mxu0 0.0
  %733 = vmatprep.subr.mxu0 0.0
  %734 = vmatpush1.msra.mxu0 0.0
  %735 = vmatprep.subr.mxu0 0.0
  %736 = vmatpush1.msra.mxu0 0.0
  %737 = vmatprep.mubr.f32.mxu0 0.0
  %738 = vmatmul.mubr.f32.gmra.mrb[0].mxu0 %v671
  %v739 = vpop.f32.mrb[0].mxu0
  %v740 = vadd.f32 0.0, %v739
  %v741 = vpop.f32.mrb[0].mxu0
  %742 = vdwg.mxu0
  %743 = vmatprep.subr.mxu0 0.0
  %744 = vmatpush1.msra.mxu0 %v40
  %745 = vmatprep.subr.mxu0 0.0
  %746 = vmatpush1.msra.mxu0 %v41
  %747 = vmatprep.subr.mxu0 0.0
  %748 = vmatpush1.msra.mxu0 %v42
  %749 = vmatprep.subr.mxu0 0.0
  %750 = vmatpush1.msra.mxu0 %v43
  %751 = vmatprep.subr.mxu0 0.0
  %752 = vmatpush1.msra.mxu0 0.0
  %753 = vmatprep.subr.mxu0 0.0
  %754 = vmatpush1.msra.mxu0 0.0
  %755 = vmatprep.subr.mxu0 0.0
  %756 = vmatpush1.msra.mxu0 0.0
  %757 = vmatprep.subr.mxu0 0.0
  %758 = vmatpush1.msra.mxu0 0.0
  %759 = vmatprep.subr.mxu0 0.0
  %760 = vmatpush1.msra.mxu0 0.0
  %761 = vmatprep.subr.mxu0 0.0
  %762 = vmatpush1.msra.mxu0 0.0
  %763 = vmatprep.subr.mxu0 0.0
  %764 = vmatpush1.msra.mxu0 0.0
  %765 = vmatprep.subr.mxu0 0.0
  %766 = vmatpush1.msra.mxu0 0.0
  %767 = vmatprep.subr.mxu0 0.0
  %768 = vmatpush1.msra.mxu0 0.0
  %769 = vmatprep.subr.mxu0 0.0
  %770 = vmatpush1.msra.mxu0 0.0
  %771 = vmatprep.subr.mxu0 0.0
  %772 = vmatpush1.msra.mxu0 0.0
  %773 = vmatprep.subr.mxu0 0.0
  %774 = vmatpush1.msra.mxu0 0.0
  %775 = vmatprep.subr.mxu0 0.0
  %776 = vmatpush1.msra.mxu0 0.0
  %777 = vmatprep.subr.mxu0 0.0
  %778 = vmatpush1.msra.mxu0 0.0
  %779 = vmatprep.subr.mxu0 0.0
  %780 = vmatpush1.msra.mxu0 0.0
  %781 = vmatprep.subr.mxu0 0.0
  %782 = vmatpush1.msra.mxu0 0.0
  %783 = vmatprep.subr.mxu0 0.0
  %784 = vmatpush1.msra.mxu0 0.0
  %785 = vmatprep.subr.mxu0 0.0
  %786 = vmatpush1.msra.mxu0 0.0
  %787 = vmatprep.subr.mxu0 0.0
  %788 = vmatpush1.msra.mxu0 0.0
  %789 = vmatprep.subr.mxu0 0.0
  %790 = vmatpush1.msra.mxu0 0.0
  %791 = vmatprep.subr.mxu0 0.0
  %792 = vmatpush1.msra.mxu0 0.0
  %793 = vmatprep.subr.mxu0 0.0
  %794 = vmatpush1.msra.mxu0 0.0
  %795 = vmatprep.subr.mxu0 0.0
  %796 = vmatpush1.msra.mxu0 0.0
  %797 = vmatprep.subr.mxu0 0.0
  %798 = vmatpush1.msra.mxu0 0.0
  %799 = vmatprep.subr.mxu0 0.0
  %800 = vmatpush1.msra.mxu0 0.0
  %801 = vmatprep.subr.mxu0 0.0
  %802 = vmatpush1.msra.mxu0 0.0
  %803 = vmatprep.subr.mxu0 0.0
  %804 = vmatpush1.msra.mxu0 0.0
  %805 = vmatprep.subr.mxu0 0.0
  %806 = vmatpush1.msra.mxu0 0.0
  %807 = vmatprep.mubr.f32.mxu0 0.0
  %808 = vmatmul.mubr.f32.gmra.mrb[0].mxu0 %v572
  %v809 = vpop.f32.mrb[0].mxu0
  %v810 = vadd.f32 %v740, %v809
  %v811 = vpop.f32.mrb[0].mxu0
  %812 = vdwg.mxu0
  %v813 = vadd.f32 %v810, %v543
  %v814 = vmul.f32 %v813, 0.5
  %v815 = vsel %vm38, %v813, %v814
  %v816 = vtanh.pop %v815
  %v817 = vmul.f32 %v816, 0.5
  %v818 = vadd.f32 %v817, 0.5
  %v819 = vsel %vm38, %v816, %v818
  %v820 = vmul.f32 %v819, %v562
  %822 = vrot.lane.b32.xlu0 %v819, 64
  %v823 = vpop.permute.xlu0 %822
  %v825 = vmul.f32 %v819, %v823
  %827 = vrot.lane.b32.xlu0 %v825, 32
  %v828 = vpop.permute.xlu0 %827
  %v830 = vadd.f32 %v820, %v828
  %v831 = vtanh.pop %v830
  %833 = vrot.lane.b32.xlu0 %v831, 64
  %v834 = vpop.permute.xlu0 %833
  %v836 = vmul.f32 %v819, %v834
  %838 = vrot.lane.b32.xlu0 %v667, 32
  %v839 = vpop.permute.xlu0 %838
  %v840 = vsel %vm202, %v839, 0
  %842 = vmatprep.subr.mxu0 0.0
  %843 = vmatpush1.msra.mxu0 %v44
  %844 = vmatprep.subr.mxu0 0.0
  %845 = vmatpush1.msra.mxu0 %v45
  %846 = vmatprep.subr.mxu0 0.0
  %847 = vmatpush1.msra.mxu0 %v46
  %848 = vmatprep.subr.mxu0 0.0
  %849 = vmatpush1.msra.mxu0 %v47
  %850 = vmatprep.subr.mxu0 0.0
  %851 = vmatpush1.msra.mxu0 0.0
  %852 = vmatprep.subr.mxu0 0.0
  %853 = vmatpush1.msra.mxu0 0.0
  %854 = vmatprep.subr.mxu0 0.0
  %855 = vmatpush1.msra.mxu0 0.0
  %856 = vmatprep.subr.mxu0 0.0
  %857 = vmatpush1.msra.mxu0 0.0
  %858 = vmatprep.subr.mxu0 0.0
  %859 = vmatpush1.msra.mxu0 0.0
  %860 = vmatprep.subr.mxu0 0.0
  %861 = vmatpush1.msra.mxu0 0.0
  %862 = vmatprep.subr.mxu0 0.0
  %863 = vmatpush1.msra.mxu0 0.0
  %864 = vmatprep.subr.mxu0 0.0
  %865 = vmatpush1.msra.mxu0 0.0
  %866 = vmatprep.subr.mxu0 0.0
  %867 = vmatpush1.msra.mxu0 0.0
  %868 = vmatprep.subr.mxu0 0.0
  %869 = vmatpush1.msra.mxu0 0.0
  %870 = vmatprep.subr.mxu0 0.0
  %871 = vmatpush1.msra.mxu0 0.0
  %872 = vmatprep.subr.mxu0 0.0
  %873 = vmatpush1.msra.mxu0 0.0
  %874 = vmatprep.subr.mxu0 0.0
  %875 = vmatpush1.msra.mxu0 0.0
  %876 = vmatprep.subr.mxu0 0.0
  %877 = vmatpush1.msra.mxu0 0.0
  %878 = vmatprep.subr.mxu0 0.0
  %879 = vmatpush1.msra.mxu0 0.0
  %880 = vmatprep.subr.mxu0 0.0
  %881 = vmatpush1.msra.mxu0 0.0
  %882 = vmatprep.subr.mxu0 0.0
  %883 = vmatpush1.msra.mxu0 0.0
  %884 = vmatprep.subr.mxu0 0.0
  %885 = vmatpush1.msra.mxu0 0.0
  %886 = vmatprep.subr.mxu0 0.0
  %887 = vmatpush1.msra.mxu0 0.0
  %888 = vmatprep.subr.mxu0 0.0
  %889 = vmatpush1.msra.mxu0 0.0
  %890 = vmatprep.subr.mxu0 0.0
  %891 = vmatpush1.msra.mxu0 0.0
  %892 = vmatprep.subr.mxu0 0.0
  %893 = vmatpush1.msra.mxu0 0.0
  %894 = vmatprep.subr.mxu0 0.0
  %895 = vmatpush1.msra.mxu0 0.0
  %896 = vmatprep.subr.mxu0 0.0
  %897 = vmatpush1.msra.mxu0 0.0
  %898 = vmatprep.subr.mxu0 0.0
  %899 = vmatpush1.msra.mxu0 0.0
  %900 = vmatprep.subr.mxu0 0.0
  %901 = vmatpush1.msra.mxu0 0.0
  %902 = vmatprep.subr.mxu0 0.0
  %903 = vmatpush1.msra.mxu0 0.0
  %904 = vmatprep.subr.mxu0 0.0
  %905 = vmatpush1.msra.mxu0 0.0
  %906 = vmatprep.mubr.f32.mxu0 0.0
  %907 = vmatmul.mubr.f32.gmra.mrb[0].mxu0 %v840
  %v908 = vpop.f32.mrb[0].mxu0
  %v909 = vadd.f32 0.0, %v908
  %v910 = vpop.f32.mrb[0].mxu0
  %911 = vdwg.mxu0
  %v912 = vadd.f32 %v179, %v909
  %v913 = vmul.f32 %v912, 0.5
  %v914 = vsel %vm38, %v912, %v913
  %v915 = vtanh.pop %v914
  %v916 = vmul.f32 %v915, 0.5
  %v917 = vadd.f32 %v916, 0.5
  %v918 = vsel %vm38, %v915, %v917
  %v919 = vmul.f32 %v918, %v661
  %921 = vrot.lane.b32.xlu0 %v918, 64
  %v922 = vpop.permute.xlu0 %921
  %v924 = vmul.f32 %v918, %v922
  %926 = vrot.lane.b32.xlu0 %v924, 32
  %v927 = vpop.permute.xlu0 %926
  %v929 = vadd.f32 %v919, %v927
  %v930 = vtanh.pop %v929
  %932 = vrot.lane.b32.xlu0 %v930, 64
  %v933 = vpop.permute.xlu0 %932
  %v935 = vmul.f32 %v918, %v933
  %937 = vrot.lane.b32.xlu0 %v836, 32
  %v938 = vpop.permute.xlu0 %937
  %v939 = vsel %vm202, %v938, 0
  %941 = vmatprep.subr.mxu0 0.0
  %942 = vmatpush1.msra.mxu0 %v48
  %943 = vmatprep.subr.mxu0 0.0
  %944 = vmatpush1.msra.mxu0 %v49
  %945 = vmatprep.subr.mxu0 0.0
  %946 = vmatpush1.msra.mxu0 %v50
  %947 = vmatprep.subr.mxu0 0.0
  %948 = vmatpush1.msra.mxu0 %v51
  %949 = vmatprep.subr.mxu0 0.0
  %950 = vmatpush1.msra.mxu0 0.0
  %951 = vmatprep.subr.mxu0 0.0
  %952 = vmatpush1.msra.mxu0 0.0
  %953 = vmatprep.subr.mxu0 0.0
  %954 = vmatpush1.msra.mxu0 0.0
  %955 = vmatprep.subr.mxu0 0.0
  %956 = vmatpush1.msra.mxu0 0.0
  %957 = vmatprep.subr.mxu0 0.0
  %958 = vmatpush1.msra.mxu0 0.0
  %959 = vmatprep.subr.mxu0 0.0
  %960 = vmatpush1.msra.mxu0 0.0
  %961 = vmatprep.subr.mxu0 0.0
  %962 = vmatpush1.msra.mxu0 0.0
  %963 = vmatprep.subr.mxu0 0.0
  %964 = vmatpush1.msra.mxu0 0.0
  %965 = vmatprep.subr.mxu0 0.0
  %966 = vmatpush1.msra.mxu0 0.0
  %967 = vmatprep.subr.mxu0 0.0
  %968 = vmatpush1.msra.mxu0 0.0
  %969 = vmatprep.subr.mxu0 0.0
  %970 = vmatpush1.msra.mxu0 0.0
  %971 = vmatprep.subr.mxu0 0.0
  %972 = vmatpush1.msra.mxu0 0.0
  %973 = vmatprep.subr.mxu0 0.0
  %974 = vmatpush1.msra.mxu0 0.0
  %975 = vmatprep.subr.mxu0 0.0
  %976 = vmatpush1.msra.mxu0 0.0
  %977 = vmatprep.subr.mxu0 0.0
  %978 = vmatpush1.msra.mxu0 0.0
  %979 = vmatprep.subr.mxu0 0.0
  %980 = vmatpush1.msra.mxu0 0.0
  %981 = vmatprep.subr.mxu0 0.0
  %982 = vmatpush1.msra.mxu0 0.0
  %983 = vmatprep.subr.mxu0 0.0
  %984 = vmatpush1.msra.mxu0 0.0
  %985 = vmatprep.subr.mxu0 0.0
  %986 = vmatpush1.msra.mxu0 0.0
  %987 = vmatprep.subr.mxu0 0.0
  %988 = vmatpush1.msra.mxu0 0.0
  %989 = vmatprep.subr.mxu0 0.0
  %990 = vmatpush1.msra.mxu0 0.0
  %991 = vmatprep.subr.mxu0 0.0
  %992 = vmatpush1.msra.mxu0 0.0
  %993 = vmatprep.subr.mxu0 0.0
  %994 = vmatpush1.msra.mxu0 0.0
  %995 = vmatprep.subr.mxu0 0.0
  %996 = vmatpush1.msra.mxu0 0.0
  %997 = vmatprep.subr.mxu0 0.0
  %998 = vmatpush1.msra.mxu0 0.0
  %999 = vmatprep.subr.mxu0 0.0
  %1000 = vmatpush1.msra.mxu0 0.0
  %1001 = vmatprep.subr.mxu0 0.0
  %1002 = vmatpush1.msra.mxu0 0.0
  %1003 = vmatprep.subr.mxu0 0.0
  %1004 = vmatpush1.msra.mxu0 0.0
  %1005 = vmatprep.mubr.f32.mxu0 0.0
  %1006 = vmatmul.mubr.f32.gmra.mrb[0].mxu0 %v939
  %v1007 = vpop.f32.mrb[0].mxu0
  %v1008 = vadd.f32 0.0, %v1007
  %v1009 = vpop.f32.mrb[0].mxu0
  %1010 = vdwg.mxu0
  %1011 = vmatprep.subr.mxu0 0.0
  %1012 = vmatpush1.msra.mxu0 %v40
  %1013 = vmatprep.subr.mxu0 0.0
  %1014 = vmatpush1.msra.mxu0 %v41
  %1015 = vmatprep.subr.mxu0 0.0
  %1016 = vmatpush1.msra.mxu0 %v42
  %1017 = vmatprep.subr.mxu0 0.0
  %1018 = vmatpush1.msra.mxu0 %v43
  %1019 = vmatprep.subr.mxu0 0.0
  %1020 = vmatpush1.msra.mxu0 0.0
  %1021 = vmatprep.subr.mxu0 0.0
  %1022 = vmatpush1.msra.mxu0 0.0
  %1023 = vmatprep.subr.mxu0 0.0
  %1024 = vmatpush1.msra.mxu0 0.0
  %1025 = vmatprep.subr.mxu0 0.0
  %1026 = vmatpush1.msra.mxu0 0.0
  %1027 = vmatprep.subr.mxu0 0.0
  %1028 = vmatpush1.msra.mxu0 0.0
  %1029 = vmatprep.subr.mxu0 0.0
  %1030 = vmatpush1.msra.mxu0 0.0
  %1031 = vmatprep.subr.mxu0 0.0
  %1032 = vmatpush1.msra.mxu0 0.0
  %1033 = vmatprep.subr.mxu0 0.0
  %1034 = vmatpush1.msra.mxu0 0.0
  %1035 = vmatprep.subr.mxu0 0.0
  %1036 = vmatpush1.msra.mxu0 0.0
  %1037 = vmatprep.subr.mxu0 0.0
  %1038 = vmatpush1.msra.mxu0 0.0
  %1039 = vmatprep.subr.mxu0 0.0
  %1040 = vmatpush1.msra.mxu0 0.0
  %1041 = vmatprep.subr.mxu0 0.0
  %1042 = vmatpush1.msra.mxu0 0.0
  %1043 = vmatprep.subr.mxu0 0.0
  %1044 = vmatpush1.msra.mxu0 0.0
  %1045 = vmatprep.subr.mxu0 0.0
  %1046 = vmatpush1.msra.mxu0 0.0
  %1047 = vmatprep.subr.mxu0 0.0
  %1048 = vmatpush1.msra.mxu0 0.0
  %1049 = vmatprep.subr.mxu0 0.0
  %1050 = vmatpush1.msra.mxu0 0.0
  %1051 = vmatprep.subr.mxu0 0.0
  %1052 = vmatpush1.msra.mxu0 0.0
  %1053 = vmatprep.subr.mxu0 0.0
  %1054 = vmatpush1.msra.mxu0 0.0
  %1055 = vmatprep.subr.mxu0 0.0
  %1056 = vmatpush1.msra.mxu0 0.0
  %1057 = vmatprep.subr.mxu0 0.0
  %1058 = vmatpush1.msra.mxu0 0.0
  %1059 = vmatprep.subr.mxu0 0.0
  %1060 = vmatpush1.msra.mxu0 0.0
  %1061 = vmatprep.subr.mxu0 0.0
  %1062 = vmatpush1.msra.mxu0 0.0
  %1063 = vmatprep.subr.mxu0 0.0
  %1064 = vmatpush1.msra.mxu0 0.0
  %1065 = vmatprep.subr.mxu0 0.0
  %1066 = vmatpush1.msra.mxu0 0.0
  %1067 = vmatprep.subr.mxu0 0.0
  %1068 = vmatpush1.msra.mxu0 0.0
  %1069 = vmatprep.subr.mxu0 0.0
  %1070 = vmatpush1.msra.mxu0 0.0
  %1071 = vmatprep.subr.mxu0 0.0
  %1072 = vmatpush1.msra.mxu0 0.0
  %1073 = vmatprep.subr.mxu0 0.0
  %1074 = vmatpush1.msra.mxu0 0.0
  %1075 = vmatprep.mubr.f32.mxu0 0.0
  %1076 = vmatmul.mubr.f32.gmra.mrb[0].mxu0 %v840
  %v1077 = vpop.f32.mrb[0].mxu0
  %v1078 = vadd.f32 %v1008, %v1077
  %v1079 = vpop.f32.mrb[0].mxu0
  %1080 = vdwg.mxu0
  %v1081 = vadd.f32 %v1078, %v543
  %v1082 = vmul.f32 %v1081, 0.5
  %v1083 = vsel %vm38, %v1081, %v1082
  %v1084 = vtanh.pop %v1083
  %v1085 = vmul.f32 %v1084, 0.5
  %v1086 = vadd.f32 %v1085, 0.5
  %v1087 = vsel %vm38, %v1084, %v1086
  %v1088 = vmul.f32 %v1087, %v830
  %1090 = vrot.lane.b32.xlu0 %v1087, 64
  %v1091 = vpop.permute.xlu0 %1090
  %v1093 = vmul.f32 %v1087, %v1091
  %1095 = vrot.lane.b32.xlu0 %v1093, 32
  %v1096 = vpop.permute.xlu0 %1095
  %v1098 = vadd.f32 %v1088, %v1096
  %v1099 = vtanh.pop %v1098
  %1101 = vrot.lane.b32.xlu0 %v1099, 64
  %v1102 = vpop.permute.xlu0 %1101
  %v1104 = vmul.f32 %v1087, %v1102
  %1106 = vrot.lane.b32.xlu0 %v935, 32
  %v1107 = vpop.permute.xlu0 %1106
  %v1108 = vsel %vm202, %v1107, 0
  %1110 = vmatprep.subr.mxu0 0.0
  %1111 = vmatpush1.msra.mxu0 %v44
  %1112 = vmatprep.subr.mxu0 0.0
  %1113 = vmatpush1.msra.mxu0 %v45
  %1114 = vmatprep.subr.mxu0 0.0
  %1115 = vmatpush1.msra.mxu0 %v46
  %1116 = vmatprep.subr.mxu0 0.0
  %1117 = vmatpush1.msra.mxu0 %v47
  %1118 = vmatprep.subr.mxu0 0.0
  %1119 = vmatpush1.msra.mxu0 0.0
  %1120 = vmatprep.subr.mxu0 0.0
  %1121 = vmatpush1.msra.mxu0 0.0
  %1122 = vmatprep.subr.mxu0 0.0
  %1123 = vmatpush1.msra.mxu0 0.0
  %1124 = vmatprep.subr.mxu0 0.0
  %1125 = vmatpush1.msra.mxu0 0.0
  %1126 = vmatprep.subr.mxu0 0.0
  %1127 = vmatpush1.msra.mxu0 0.0
  %1128 = vmatprep.subr.mxu0 0.0
  %1129 = vmatpush1.msra.mxu0 0.0
  %1130 = vmatprep.subr.mxu0 0.0
  %1131 = vmatpush1.msra.mxu0 0.0
  %1132 = vmatprep.subr.mxu0 0.0
  %1133 = vmatpush1.msra.mxu0 0.0
  %1134 = vmatprep.subr.mxu0 0.0
  %1135 = vmatpush1.msra.mxu0 0.0
  %1136 = vmatprep.subr.mxu0 0.0
  %1137 = vmatpush1.msra.mxu0 0.0
  %1138 = vmatprep.subr.mxu0 0.0
  %1139 = vmatpush1.msra.mxu0 0.0
  %1140 = vmatprep.subr.mxu0 0.0
  %1141 = vmatpush1.msra.mxu0 0.0
  %1142 = vmatprep.subr.mxu0 0.0
  %1143 = vmatpush1.msra.mxu0 0.0
  %1144 = vmatprep.subr.mxu0 0.0
  %1145 = vmatpush1.msra.mxu0 0.0
  %1146 = vmatprep.subr.mxu0 0.0
  %1147 = vmatpush1.msra.mxu0 0.0
  %1148 = vmatprep.subr.mxu0 0.0
  %1149 = vmatpush1.msra.mxu0 0.0
  %1150 = vmatprep.subr.mxu0 0.0
  %1151 = vmatpush1.msra.mxu0 0.0
  %1152 = vmatprep.subr.mxu0 0.0
  %1153 = vmatpush1.msra.mxu0 0.0
  %1154 = vmatprep.subr.mxu0 0.0
  %1155 = vmatpush1.msra.mxu0 0.0
  %1156 = vmatprep.subr.mxu0 0.0
  %1157 = vmatpush1.msra.mxu0 0.0
  %1158 = vmatprep.subr.mxu0 0.0
  %1159 = vmatpush1.msra.mxu0 0.0
  %1160 = vmatprep.subr.mxu0 0.0
  %1161 = vmatpush1.msra.mxu0 0.0
  %1162 = vmatprep.subr.mxu0 0.0
  %1163 = vmatpush1.msra.mxu0 0.0
  %1164 = vmatprep.subr.mxu0 0.0
  %1165 = vmatpush1.msra.mxu0 0.0
  %1166 = vmatprep.subr.mxu0 0.0
  %1167 = vmatpush1.msra.mxu0 0.0
  %1168 = vmatprep.subr.mxu0 0.0
  %1169 = vmatpush1.msra.mxu0 0.0
  %1170 = vmatprep.subr.mxu0 0.0
  %1171 = vmatpush1.msra.mxu0 0.0
  %1172 = vmatprep.subr.mxu0 0.0
  %1173 = vmatpush1.msra.mxu0 0.0
  %1174 = vmatprep.mubr.f32.mxu0 0.0
  %1175 = vmatmul.mubr.f32.gmra.mrb[0].mxu0 %v1108
  %v1176 = vpop.f32.mrb[0].mxu0
  %v1177 = vadd.f32 0.0, %v1176
  %v1178 = vpop.f32.mrb[0].mxu0
  %1179 = vdwg.mxu0
  %v1180 = vadd.f32 %v184, %v1177
  %v1181 = vmul.f32 %v1180, 0.5
  %v1182 = vsel %vm38, %v1180, %v1181
  %v1183 = vtanh.pop %v1182
  %v1184 = vmul.f32 %v1183, 0.5
  %v1185 = vadd.f32 %v1184, 0.5
  %v1186 = vsel %vm38, %v1183, %v1185
  %v1187 = vmul.f32 %v1186, %v929
  %1189 = vrot.lane.b32.xlu0 %v1186, 64
  %v1190 = vpop.permute.xlu0 %1189
  %v1192 = vmul.f32 %v1186, %v1190
  %1194 = vrot.lane.b32.xlu0 %v1192, 32
  %v1195 = vpop.permute.xlu0 %1194
  %v1197 = vadd.f32 %v1187, %v1195
  %v1198 = vtanh.pop %v1197
  %1200 = vrot.lane.b32.xlu0 %v1198, 64
  %v1201 = vpop.permute.xlu0 %1200
  %v1203 = vmul.f32 %v1186, %v1201
  %1205 = vrot.lane.b32.xlu0 %v1104, 32
  %v1206 = vpop.permute.xlu0 %1205
  %v1207 = vsel %vm202, %v1206, 0
  %1209 = vmatprep.subr.mxu0 0.0
  %1210 = vmatpush1.msra.mxu0 %v48
  %1211 = vmatprep.subr.mxu0 0.0
  %1212 = vmatpush1.msra.mxu0 %v49
  %1213 = vmatprep.subr.mxu0 0.0
  %1214 = vmatpush1.msra.mxu0 %v50
  %1215 = vmatprep.subr.mxu0 0.0
  %1216 = vmatpush1.msra.mxu0 %v51
  %1217 = vmatprep.subr.mxu0 0.0
  %1218 = vmatpush1.msra.mxu0 0.0
  %1219 = vmatprep.subr.mxu0 0.0
  %1220 = vmatpush1.msra.mxu0 0.0
  %1221 = vmatprep.subr.mxu0 0.0
  %1222 = vmatpush1.msra.mxu0 0.0
  %1223 = vmatprep.subr.mxu0 0.0
  %1224 = vmatpush1.msra.mxu0 0.0
  %1225 = vmatprep.subr.mxu0 0.0
  %1226 = vmatpush1.msra.mxu0 0.0
  %1227 = vmatprep.subr.mxu0 0.0
  %1228 = vmatpush1.msra.mxu0 0.0
  %1229 = vmatprep.subr.mxu0 0.0
  %1230 = vmatpush1.msra.mxu0 0.0
  %1231 = vmatprep.subr.mxu0 0.0
  %1232 = vmatpush1.msra.mxu0 0.0
  %1233 = vmatprep.subr.mxu0 0.0
  %1234 = vmatpush1.msra.mxu0 0.0
  %1235 = vmatprep.subr.mxu0 0.0
  %1236 = vmatpush1.msra.mxu0 0.0
  %1237 = vmatprep.subr.mxu0 0.0
  %1238 = vmatpush1.msra.mxu0 0.0
  %1239 = vmatprep.subr.mxu0 0.0
  %1240 = vmatpush1.msra.mxu0 0.0
  %1241 = vmatprep.subr.mxu0 0.0
  %1242 = vmatpush1.msra.mxu0 0.0
  %1243 = vmatprep.subr.mxu0 0.0
  %1244 = vmatpush1.msra.mxu0 0.0
  %1245 = vmatprep.subr.mxu0 0.0
  %1246 = vmatpush1.msra.mxu0 0.0
  %1247 = vmatprep.subr.mxu0 0.0
  %1248 = vmatpush1.msra.mxu0 0.0
  %1249 = vmatprep.subr.mxu0 0.0
  %1250 = vmatpush1.msra.mxu0 0.0
  %1251 = vmatprep.subr.mxu0 0.0
  %1252 = vmatpush1.msra.mxu0 0.0
  %1253 = vmatprep.subr.mxu0 0.0
  %1254 = vmatpush1.msra.mxu0 0.0
  %1255 = vmatprep.subr.mxu0 0.0
  %1256 = vmatpush1.msra.mxu0 0.0
  %1257 = vmatprep.subr.mxu0 0.0
  %1258 = vmatpush1.msra.mxu0 0.0
  %1259 = vmatprep.subr.mxu0 0.0
  %1260 = vmatpush1.msra.mxu0 0.0
  %1261 = vmatprep.subr.mxu0 0.0
  %1262 = vmatpush1.msra.mxu0 0.0
  %1263 = vmatprep.subr.mxu0 0.0
  %1264 = vmatpush1.msra.mxu0 0.0
  %1265 = vmatprep.subr.mxu0 0.0
  %1266 = vmatpush1.msra.mxu0 0.0
  %1267 = vmatprep.subr.mxu0 0.0
  %1268 = vmatpush1.msra.mxu0 0.0
  %1269 = vmatprep.subr.mxu0 0.0
  %1270 = vmatpush1.msra.mxu0 0.0
  %1271 = vmatprep.subr.mxu0 0.0
  %1272 = vmatpush1.msra.mxu0 0.0
  %1273 = vmatprep.mubr.f32.mxu0 0.0
  %1274 = vmatmul.mubr.f32.gmra.mrb[0].mxu0 %v1207
  %v1275 = vpop.f32.mrb[0].mxu0
  %v1276 = vadd.f32 0.0, %v1275
  %v1277 = vpop.f32.mrb[0].mxu0
  %1278 = vdwg.mxu0
  %1279 = vmatprep.subr.mxu0 0.0
  %1280 = vmatpush1.msra.mxu0 %v40
  %1281 = vmatprep.subr.mxu0 0.0
  %1282 = vmatpush1.msra.mxu0 %v41
  %1283 = vmatprep.subr.mxu0 0.0
  %1284 = vmatpush1.msra.mxu0 %v42
  %1285 = vmatprep.subr.mxu0 0.0
  %1286 = vmatpush1.msra.mxu0 %v43
  %1287 = vmatprep.subr.mxu0 0.0
  %1288 = vmatpush1.msra.mxu0 0.0
  %1289 = vmatprep.subr.mxu0 0.0
  %1290 = vmatpush1.msra.mxu0 0.0
  %1291 = vmatprep.subr.mxu0 0.0
  %1292 = vmatpush1.msra.mxu0 0.0
  %1293 = vmatprep.subr.mxu0 0.0
  %1294 = vmatpush1.msra.mxu0 0.0
  %1295 = vmatprep.subr.mxu0 0.0
  %1296 = vmatpush1.msra.mxu0 0.0
  %1297 = vmatprep.subr.mxu0 0.0
  %1298 = vmatpush1.msra.mxu0 0.0
  %1299 = vmatprep.subr.mxu0 0.0
  %1300 = vmatpush1.msra.mxu0 0.0
  %1301 = vmatprep.subr.mxu0 0.0
  %1302 = vmatpush1.msra.mxu0 0.0
  %1303 = vmatprep.subr.mxu0 0.0
  %1304 = vmatpush1.msra.mxu0 0.0
  %1305 = vmatprep.subr.mxu0 0.0
  %1306 = vmatpush1.msra.mxu0 0.0
  %1307 = vmatprep.subr.mxu0 0.0
  %1308 = vmatpush1.msra.mxu0 0.0
  %1309 = vmatprep.subr.mxu0 0.0
  %1310 = vmatpush1.msra.mxu0 0.0
  %1311 = vmatprep.subr.mxu0 0.0
  %1312 = vmatpush1.msra.mxu0 0.0
  %1313 = vmatprep.subr.mxu0 0.0
  %1314 = vmatpush1.msra.mxu0 0.0
  %1315 = vmatprep.subr.mxu0 0.0
  %1316 = vmatpush1.msra.mxu0 0.0
  %1317 = vmatprep.subr.mxu0 0.0
  %1318 = vmatpush1.msra.mxu0 0.0
  %1319 = vmatprep.subr.mxu0 0.0
  %1320 = vmatpush1.msra.mxu0 0.0
  %1321 = vmatprep.subr.mxu0 0.0
  %1322 = vmatpush1.msra.mxu0 0.0
  %1323 = vmatprep.subr.mxu0 0.0
  %1324 = vmatpush1.msra.mxu0 0.0
  %1325 = vmatprep.subr.mxu0 0.0
  %1326 = vmatpush1.msra.mxu0 0.0
  %1327 = vmatprep.subr.mxu0 0.0
  %1328 = vmatpush1.msra.mxu0 0.0
  %1329 = vmatprep.subr.mxu0 0.0
  %1330 = vmatpush1.msra.mxu0 0.0
  %1331 = vmatprep.subr.mxu0 0.0
  %1332 = vmatpush1.msra.mxu0 0.0
  %1333 = vmatprep.subr.mxu0 0.0
  %1334 = vmatpush1.msra.mxu0 0.0
  %1335 = vmatprep.subr.mxu0 0.0
  %1336 = vmatpush1.msra.mxu0 0.0
  %1337 = vmatprep.subr.mxu0 0.0
  %1338 = vmatpush1.msra.mxu0 0.0
  %1339 = vmatprep.subr.mxu0 0.0
  %1340 = vmatpush1.msra.mxu0 0.0
  %1341 = vmatprep.subr.mxu0 0.0
  %1342 = vmatpush1.msra.mxu0 0.0
  %1343 = vmatprep.mubr.f32.mxu0 0.0
  %1344 = vmatmul.mubr.f32.gmra.mrb[0].mxu0 %v1108
  %v1345 = vpop.f32.mrb[0].mxu0
  %v1346 = vadd.f32 %v1276, %v1345
  %v1347 = vpop.f32.mrb[0].mxu0
  %1348 = vdwg.mxu0
  %v1349 = vadd.f32 %v1346, %v543
  %v1350 = vmul.f32 %v1349, 0.5
  %v1351 = vsel %vm38, %v1349, %v1350
  %v1352 = vtanh.pop %v1351
  %v1353 = vmul.f32 %v1352, 0.5
  %v1354 = vadd.f32 %v1353, 0.5
  %v1355 = vsel %vm38, %v1352, %v1354
  %v1356 = vmul.f32 %v1355, %v1098
  %1358 = vrot.lane.b32.xlu0 %v1355, 64
  %v1359 = vpop.permute.xlu0 %1358
  %v1361 = vmul.f32 %v1355, %v1359
  %1363 = vrot.lane.b32.xlu0 %v1361, 32
  %v1364 = vpop.permute.xlu0 %1363
  %v1366 = vadd.f32 %v1356, %v1364
  %v1367 = vtanh.pop %v1366
  %1369 = vrot.lane.b32.xlu0 %v1367, 64
  %v1370 = vpop.permute.xlu0 %1369
  %v1372 = vmul.f32 %v1355, %v1370
  %1374 = vrot.lane.b32.xlu0 %v1203, 32
  %v1375 = vpop.permute.xlu0 %1374
  %v1376 = vsel %vm202, %v1375, 0
  %1378 = vmatprep.subr.mxu0 0.0
  %1379 = vmatpush1.msra.mxu0 %v44
  %1380 = vmatprep.subr.mxu0 0.0
  %1381 = vmatpush1.msra.mxu0 %v45
  %1382 = vmatprep.subr.mxu0 0.0
  %1383 = vmatpush1.msra.mxu0 %v46
  %1384 = vmatprep.subr.mxu0 0.0
  %1385 = vmatpush1.msra.mxu0 %v47
  %1386 = vmatprep.subr.mxu0 0.0
  %1387 = vmatpush1.msra.mxu0 0.0
  %1388 = vmatprep.subr.mxu0 0.0
  %1389 = vmatpush1.msra.mxu0 0.0
  %1390 = vmatprep.subr.mxu0 0.0
  %1391 = vmatpush1.msra.mxu0 0.0
  %1392 = vmatprep.subr.mxu0 0.0
  %1393 = vmatpush1.msra.mxu0 0.0
  %1394 = vmatprep.subr.mxu0 0.0
  %1395 = vmatpush1.msra.mxu0 0.0
  %1396 = vmatprep.subr.mxu0 0.0
  %1397 = vmatpush1.msra.mxu0 0.0
  %1398 = vmatprep.subr.mxu0 0.0
  %1399 = vmatpush1.msra.mxu0 0.0
  %1400 = vmatprep.subr.mxu0 0.0
  %1401 = vmatpush1.msra.mxu0 0.0
  %1402 = vmatprep.subr.mxu0 0.0
  %1403 = vmatpush1.msra.mxu0 0.0
  %1404 = vmatprep.subr.mxu0 0.0
  %1405 = vmatpush1.msra.mxu0 0.0
  %1406 = vmatprep.subr.mxu0 0.0
  %1407 = vmatpush1.msra.mxu0 0.0
  %1408 = vmatprep.subr.mxu0 0.0
  %1409 = vmatpush1.msra.mxu0 0.0
  %1410 = vmatprep.subr.mxu0 0.0
  %1411 = vmatpush1.msra.mxu0 0.0
  %1412 = vmatprep.subr.mxu0 0.0
  %1413 = vmatpush1.msra.mxu0 0.0
  %1414 = vmatprep.subr.mxu0 0.0
  %1415 = vmatpush1.msra.mxu0 0.0
  %1416 = vmatprep.subr.mxu0 0.0
  %1417 = vmatpush1.msra.mxu0 0.0
  %1418 = vmatprep.subr.mxu0 0.0
  %1419 = vmatpush1.msra.mxu0 0.0
  %1420 = vmatprep.subr.mxu0 0.0
  %1421 = vmatpush1.msra.mxu0 0.0
  %1422 = vmatprep.subr.mxu0 0.0
  %1423 = vmatpush1.msra.mxu0 0.0
  %1424 = vmatprep.subr.mxu0 0.0
  %1425 = vmatpush1.msra.mxu0 0.0
  %1426 = vmatprep.subr.mxu0 0.0
  %1427 = vmatpush1.msra.mxu0 0.0
  %1428 = vmatprep.subr.mxu0 0.0
  %1429 = vmatpush1.msra.mxu0 0.0
  %1430 = vmatprep.subr.mxu0 0.0
  %1431 = vmatpush1.msra.mxu0 0.0
  %1432 = vmatprep.subr.mxu0 0.0
  %1433 = vmatpush1.msra.mxu0 0.0
  %1434 = vmatprep.subr.mxu0 0.0
  %1435 = vmatpush1.msra.mxu0 0.0
  %1436 = vmatprep.subr.mxu0 0.0
  %1437 = vmatpush1.msra.mxu0 0.0
  %1438 = vmatprep.subr.mxu0 0.0
  %1439 = vmatpush1.msra.mxu0 0.0
  %1440 = vmatprep.subr.mxu0 0.0
  %1441 = vmatpush1.msra.mxu0 0.0
  %1442 = vmatprep.mubr.f32.mxu0 0.0
  %1443 = vmatmul.mubr.f32.gmra.mrb[0].mxu0 %v1376
  %v1444 = vpop.f32.mrb[0].mxu0
  %v1445 = vadd.f32 0.0, %v1444
  %v1446 = vpop.f32.mrb[0].mxu0
  %1447 = vdwg.mxu0
  %v1448 = vadd.f32 %v189, %v1445
  %v1449 = vmul.f32 %v1448, 0.5
  %v1450 = vsel %vm38, %v1448, %v1449
  %v1451 = vtanh.pop %v1450
  %v1452 = vmul.f32 %v1451, 0.5
  %v1453 = vadd.f32 %v1452, 0.5
  %v1454 = vsel %vm38, %v1451, %v1453
  %v1455 = vmul.f32 %v1454, %v1197
  %1457 = vrot.lane.b32.xlu0 %v1454, 64
  %v1458 = vpop.permute.xlu0 %1457
  %v1460 = vmul.f32 %v1454, %v1458
  %1462 = vrot.lane.b32.xlu0 %v1460, 32
  %v1463 = vpop.permute.xlu0 %1462
  %v1465 = vadd.f32 %v1455, %v1463
  %v1466 = vtanh.pop %v1465
  %1468 = vrot.lane.b32.xlu0 %v1466, 64
  %v1469 = vpop.permute.xlu0 %1468
  %v1471 = vmul.f32 %v1454, %v1469
  %1473 = vrot.lane.b32.xlu0 %v1372, 32
  %v1474 = vpop.permute.xlu0 %1473
  %v1475 = vsel %vm202, %v1474, 0
  %1477 = vmatprep.subr.mxu0 0.0
  %1478 = vmatpush1.msra.mxu0 %v48
  %1479 = vmatprep.subr.mxu0 0.0
  %1480 = vmatpush1.msra.mxu0 %v49
  %1481 = vmatprep.subr.mxu0 0.0
  %1482 = vmatpush1.msra.mxu0 %v50
  %1483 = vmatprep.subr.mxu0 0.0
  %1484 = vmatpush1.msra.mxu0 %v51
  %1485 = vmatprep.subr.mxu0 0.0
  %1486 = vmatpush1.msra.mxu0 0.0
  %1487 = vmatprep.subr.mxu0 0.0
  %1488 = vmatpush1.msra.mxu0 0.0
  %1489 = vmatprep.subr.mxu0 0.0
  %1490 = vmatpush1.msra.mxu0 0.0
  %1491 = vmatprep.subr.mxu0 0.0
  %1492 = vmatpush1.msra.mxu0 0.0
  %1493 = vmatprep.subr.mxu0 0.0
  %1494 = vmatpush1.msra.mxu0 0.0
  %1495 = vmatprep.subr.mxu0 0.0
  %1496 = vmatpush1.msra.mxu0 0.0
  %1497 = vmatprep.subr.mxu0 0.0
  %1498 = vmatpush1.msra.mxu0 0.0
  %1499 = vmatprep.subr.mxu0 0.0
  %1500 = vmatpush1.msra.mxu0 0.0
  %1501 = vmatprep.subr.mxu0 0.0
  %1502 = vmatpush1.msra.mxu0 0.0
  %1503 = vmatprep.subr.mxu0 0.0
  %1504 = vmatpush1.msra.mxu0 0.0
  %1505 = vmatprep.subr.mxu0 0.0
  %1506 = vmatpush1.msra.mxu0 0.0
  %1507 = vmatprep.subr.mxu0 0.0
  %1508 = vmatpush1.msra.mxu0 0.0
  %1509 = vmatprep.subr.mxu0 0.0
  %1510 = vmatpush1.msra.mxu0 0.0
  %1511 = vmatprep.subr.mxu0 0.0
  %1512 = vmatpush1.msra.mxu0 0.0
  %1513 = vmatprep.subr.mxu0 0.0
  %1514 = vmatpush1.msra.mxu0 0.0
  %1515 = vmatprep.subr.mxu0 0.0
  %1516 = vmatpush1.msra.mxu0 0.0
  %1517 = vmatprep.subr.mxu0 0.0
  %1518 = vmatpush1.msra.mxu0 0.0
  %1519 = vmatprep.subr.mxu0 0.0
  %1520 = vmatpush1.msra.mxu0 0.0
  %1521 = vmatprep.subr.mxu0 0.0
  %1522 = vmatpush1.msra.mxu0 0.0
  %1523 = vmatprep.subr.mxu0 0.0
  %1524 = vmatpush1.msra.mxu0 0.0
  %1525 = vmatprep.subr.mxu0 0.0
  %1526 = vmatpush1.msra.mxu0 0.0
  %1527 = vmatprep.subr.mxu0 0.0
  %1528 = vmatpush1.msra.mxu0 0.0
  %1529 = vmatprep.subr.mxu0 0.0
  %1530 = vmatpush1.msra.mxu0 0.0
  %1531 = vmatprep.subr.mxu0 0.0
  %1532 = vmatpush1.msra.mxu0 0.0
  %1533 = vmatprep.subr.mxu0 0.0
  %1534 = vmatpush1.msra.mxu0 0.0
  %1535 = vmatprep.subr.mxu0 0.0
  %1536 = vmatpush1.msra.mxu0 0.0
  %1537 = vmatprep.subr.mxu0 0.0
  %1538 = vmatpush1.msra.mxu0 0.0
  %1539 = vmatprep.subr.mxu0 0.0
  %1540 = vmatpush1.msra.mxu0 0.0
  %1541 = vmatprep.mubr.f32.mxu0 0.0
  %1542 = vmatmul.mubr.f32.gmra.mrb[0].mxu0 %v1475
  %v1543 = vpop.f32.mrb[0].mxu0
  %v1544 = vadd.f32 0.0, %v1543
  %v1545 = vpop.f32.mrb[0].mxu0
  %1546 = vdwg.mxu0
  %1547 = vmatprep.subr.mxu0 0.0
  %1548 = vmatpush1.msra.mxu0 %v40
  %1549 = vmatprep.subr.mxu0 0.0
  %1550 = vmatpush1.msra.mxu0 %v41
  %1551 = vmatprep.subr.mxu0 0.0
  %1552 = vmatpush1.msra.mxu0 %v42
  %1553 = vmatprep.subr.mxu0 0.0
  %1554 = vmatpush1.msra.mxu0 %v43
  %1555 = vmatprep.subr.mxu0 0.0
  %1556 = vmatpush1.msra.mxu0 0.0
  %1557 = vmatprep.subr.mxu0 0.0
  %1558 = vmatpush1.msra.mxu0 0.0
  %1559 = vmatprep.subr.mxu0 0.0
  %1560 = vmatpush1.msra.mxu0 0.0
  %1561 = vmatprep.subr.mxu0 0.0
  %1562 = vmatpush1.msra.mxu0 0.0
  %1563 = vmatprep.subr.mxu0 0.0
  %1564 = vmatpush1.msra.mxu0 0.0
  %1565 = vmatprep.subr.mxu0 0.0
  %1566 = vmatpush1.msra.mxu0 0.0
  %1567 = vmatprep.subr.mxu0 0.0
  %1568 = vmatpush1.msra.mxu0 0.0
  %1569 = vmatprep.subr.mxu0 0.0
  %1570 = vmatpush1.msra.mxu0 0.0
  %1571 = vmatprep.subr.mxu0 0.0
  %1572 = vmatpush1.msra.mxu0 0.0
  %1573 = vmatprep.subr.mxu0 0.0
  %1574 = vmatpush1.msra.mxu0 0.0
  %1575 = vmatprep.subr.mxu0 0.0
  %1576 = vmatpush1.msra.mxu0 0.0
  %1577 = vmatprep.subr.mxu0 0.0
  %1578 = vmatpush1.msra.mxu0 0.0
  %1579 = vmatprep.subr.mxu0 0.0
  %1580 = vmatpush1.msra.mxu0 0.0
  %1581 = vmatprep.subr.mxu0 0.0
  %1582 = vmatpush1.msra.mxu0 0.0
  %1583 = vmatprep.subr.mxu0 0.0
  %1584 = vmatpush1.msra.mxu0 0.0
  %1585 = vmatprep.subr.mxu0 0.0
  %1586 = vmatpush1.msra.mxu0 0.0
  %1587 = vmatprep.subr.mxu0 0.0
  %1588 = vmatpush1.msra.mxu0 0.0
  %1589 = vmatprep.subr.mxu0 0.0
  %1590 = vmatpush1.msra.mxu0 0.0
  %1591 = vmatprep.subr.mxu0 0.0
  %1592 = vmatpush1.msra.mxu0 0.0
  %1593 = vmatprep.subr.mxu0 0.0
  %1594 = vmatpush1.msra.mxu0 0.0
  %1595 = vmatprep.subr.mxu0 0.0
  %1596 = vmatpush1.msra.mxu0 0.0
  %1597 = vmatprep.subr.mxu0 0.0
  %1598 = vmatpush1.msra.mxu0 0.0
  %1599 = vmatprep.subr.mxu0 0.0
  %1600 = vmatpush1.msra.mxu0 0.0
  %1601 = vmatprep.subr.mxu0 0.0
  %1602 = vmatpush1.msra.mxu0 0.0
  %1603 = vmatprep.subr.mxu0 0.0
  %1604 = vmatpush1.msra.mxu0 0.0
  %1605 = vmatprep.subr.mxu0 0.0
  %1606 = vmatpush1.msra.mxu0 0.0
  %1607 = vmatprep.subr.mxu0 0.0
  %1608 = vmatpush1.msra.mxu0 0.0
  %1609 = vmatprep.subr.mxu0 0.0
  %1610 = vmatpush1.msra.mxu0 0.0
  %1611 = vmatprep.mubr.f32.mxu0 0.0
  %1612 = vmatmul.mubr.f32.gmra.mrb[0].mxu0 %v1376
  %v1613 = vpop.f32.mrb[0].mxu0
  %v1614 = vadd.f32 %v1544, %v1613
  %v1615 = vpop.f32.mrb[0].mxu0
  %1616 = vdwg.mxu0
  %v1617 = vadd.f32 %v1614, %v543
  %v1618 = vmul.f32 %v1617, 0.5
  %v1619 = vsel %vm38, %v1617, %v1618
  %v1620 = vtanh.pop %v1619
  %v1621 = vmul.f32 %v1620, 0.5
  %v1622 = vadd.f32 %v1621, 0.5
  %v1623 = vsel %vm38, %v1620, %v1622
  %v1624 = vmul.f32 %v1623, %v1366
  %1626 = vrot.lane.b32.xlu0 %v1623, 64
  %v1627 = vpop.permute.xlu0 %1626
  %v1629 = vmul.f32 %v1623, %v1627
  %1631 = vrot.lane.b32.xlu0 %v1629, 32
  %v1632 = vpop.permute.xlu0 %1631
  %v1634 = vadd.f32 %v1624, %v1632
  %v1635 = vtanh.pop %v1634
  %1637 = vrot.lane.b32.xlu0 %v1635, 64
  %v1638 = vpop.permute.xlu0 %1637
  %v1640 = vmul.f32 %v1623, %v1638
  %1642 = vrot.lane.b32.xlu0 %v1471, 32
  %v1643 = vpop.permute.xlu0 %1642
  %v1644 = vsel %vm202, %v1643, 0
  %1646 = vmatprep.subr.mxu0 0.0
  %1647 = vmatpush1.msra.mxu0 %v44
  %1648 = vmatprep.subr.mxu0 0.0
  %1649 = vmatpush1.msra.mxu0 %v45
  %1650 = vmatprep.subr.mxu0 0.0
  %1651 = vmatpush1.msra.mxu0 %v46
  %1652 = vmatprep.subr.mxu0 0.0
  %1653 = vmatpush1.msra.mxu0 %v47
  %1654 = vmatprep.subr.mxu0 0.0
  %1655 = vmatpush1.msra.mxu0 0.0
  %1656 = vmatprep.subr.mxu0 0.0
  %1657 = vmatpush1.msra.mxu0 0.0
  %1658 = vmatprep.subr.mxu0 0.0
  %1659 = vmatpush1.msra.mxu0 0.0
  %1660 = vmatprep.subr.mxu0 0.0
  %1661 = vmatpush1.msra.mxu0 0.0
  %1662 = vmatprep.subr.mxu0 0.0
  %1663 = vmatpush1.msra.mxu0 0.0
  %1664 = vmatprep.subr.mxu0 0.0
  %1665 = vmatpush1.msra.mxu0 0.0
  %1666 = vmatprep.subr.mxu0 0.0
  %1667 = vmatpush1.msra.mxu0 0.0
  %1668 = vmatprep.subr.mxu0 0.0
  %1669 = vmatpush1.msra.mxu0 0.0
  %1670 = vmatprep.subr.mxu0 0.0
  %1671 = vmatpush1.msra.mxu0 0.0
  %1672 = vmatprep.subr.mxu0 0.0
  %1673 = vmatpush1.msra.mxu0 0.0
  %1674 = vmatprep.subr.mxu0 0.0
  %1675 = vmatpush1.msra.mxu0 0.0
  %1676 = vmatprep.subr.mxu0 0.0
  %1677 = vmatpush1.msra.mxu0 0.0
  %1678 = vmatprep.subr.mxu0 0.0
  %1679 = vmatpush1.msra.mxu0 0.0
  %1680 = vmatprep.subr.mxu0 0.0
  %1681 = vmatpush1.msra.mxu0 0.0
  %1682 = vmatprep.subr.mxu0 0.0
  %1683 = vmatpush1.msra.mxu0 0.0
  %1684 = vmatprep.subr.mxu0 0.0
  %1685 = vmatpush1.msra.mxu0 0.0
  %1686 = vmatprep.subr.mxu0 0.0
  %1687 = vmatpush1.msra.mxu0 0.0
  %1688 = vmatprep.subr.mxu0 0.0
  %1689 = vmatpush1.msra.mxu0 0.0
  %1690 = vmatprep.subr.mxu0 0.0
  %1691 = vmatpush1.msra.mxu0 0.0
  %1692 = vmatprep.subr.mxu0 0.0
  %1693 = vmatpush1.msra.mxu0 0.0
  %1694 = vmatprep.subr.mxu0 0.0
  %1695 = vmatpush1.msra.mxu0 0.0
  %1696 = vmatprep.subr.mxu0 0.0
  %1697 = vmatpush1.msra.mxu0 0.0
  %1698 = vmatprep.subr.mxu0 0.0
  %1699 = vmatpush1.msra.mxu0 0.0
  %1700 = vmatprep.subr.mxu0 0.0
  %1701 = vmatpush1.msra.mxu0 0.0
  %1702 = vmatprep.subr.mxu0 0.0
  %1703 = vmatpush1.msra.mxu0 0.0
  %1704 = vmatprep.subr.mxu0 0.0
  %1705 = vmatpush1.msra.mxu0 0.0
  %1706 = vmatprep.subr.mxu0 0.0
  %1707 = vmatpush1.msra.mxu0 0.0
  %1708 = vmatprep.subr.mxu0 0.0
  %1709 = vmatpush1.msra.mxu0 0.0
  %1710 = vmatprep.mubr.f32.mxu0 0.0
  %1711 = vmatmul.mubr.f32.gmra.mrb[0].mxu0 %v1644
  %v1712 = vpop.f32.mrb[0].mxu0
  %v1713 = vadd.f32 0.0, %v1712
  %v1714 = vpop.f32.mrb[0].mxu0
  %1715 = vdwg.mxu0
  %v1716 = vadd.f32 %v194, %v1713
  %v1717 = vmul.f32 %v1716, 0.5
  %v1718 = vsel %vm38, %v1716, %v1717
  %v1719 = vtanh.pop %v1718
  %v1720 = vmul.f32 %v1719, 0.5
  %v1721 = vadd.f32 %v1720, 0.5
  %v1722 = vsel %vm38, %v1719, %v1721
  %v1723 = vmul.f32 %v1722, %v1465
  %1725 = vrot.lane.b32.xlu0 %v1722, 64
  %v1726 = vpop.permute.xlu0 %1725
  %v1728 = vmul.f32 %v1722, %v1726
  %1730 = vrot.lane.b32.xlu0 %v1728, 32
  %v1731 = vpop.permute.xlu0 %1730
  %v1733 = vadd.f32 %v1723, %v1731
  %v1734 = vtanh.pop %v1733
  %1736 = vrot.lane.b32.xlu0 %v1734, 64
  %v1737 = vpop.permute.xlu0 %1736
  %v1739 = vmul.f32 %v1722, %v1737
  %1741 = vrot.lane.b32.xlu0 %v1640, 32
  %v1742 = vpop.permute.xlu0 %1741
  %v1743 = vsel %vm202, %v1742, 0
  %1745 = vmatprep.subr.mxu0 0.0
  %1746 = vmatpush1.msra.mxu0 %v48
  %1747 = vmatprep.subr.mxu0 0.0
  %1748 = vmatpush1.msra.mxu0 %v49
  %1749 = vmatprep.subr.mxu0 0.0
  %1750 = vmatpush1.msra.mxu0 %v50
  %1751 = vmatprep.subr.mxu0 0.0
  %1752 = vmatpush1.msra.mxu0 %v51
  %1753 = vmatprep.subr.mxu0 0.0
  %1754 = vmatpush1.msra.mxu0 0.0
  %1755 = vmatprep.subr.mxu0 0.0
  %1756 = vmatpush1.msra.mxu0 0.0
  %1757 = vmatprep.subr.mxu0 0.0
  %1758 = vmatpush1.msra.mxu0 0.0
  %1759 = vmatprep.subr.mxu0 0.0
  %1760 = vmatpush1.msra.mxu0 0.0
  %1761 = vmatprep.subr.mxu0 0.0
  %1762 = vmatpush1.msra.mxu0 0.0
  %1763 = vmatprep.subr.mxu0 0.0
  %1764 = vmatpush1.msra.mxu0 0.0
  %1765 = vmatprep.subr.mxu0 0.0
  %1766 = vmatpush1.msra.mxu0 0.0
  %1767 = vmatprep.subr.mxu0 0.0
  %1768 = vmatpush1.msra.mxu0 0.0
  %1769 = vmatprep.subr.mxu0 0.0
  %1770 = vmatpush1.msra.mxu0 0.0
  %1771 = vmatprep.subr.mxu0 0.0
  %1772 = vmatpush1.msra.mxu0 0.0
  %1773 = vmatprep.subr.mxu0 0.0
  %1774 = vmatpush1.msra.mxu0 0.0
  %1775 = vmatprep.subr.mxu0 0.0
  %1776 = vmatpush1.msra.mxu0 0.0
  %1777 = vmatprep.subr.mxu0 0.0
  %1778 = vmatpush1.msra.mxu0 0.0
  %1779 = vmatprep.subr.mxu0 0.0
  %1780 = vmatpush1.msra.mxu0 0.0
  %1781 = vmatprep.subr.mxu0 0.0
  %1782 = vmatpush1.msra.mxu0 0.0
  %1783 = vmatprep.subr.mxu0 0.0
  %1784 = vmatpush1.msra.mxu0 0.0
  %1785 = vmatprep.subr.mxu0 0.0
  %1786 = vmatpush1.msra.mxu0 0.0
  %1787 = vmatprep.subr.mxu0 0.0
  %1788 = vmatpush1.msra.mxu0 0.0
  %1789 = vmatprep.subr.mxu0 0.0
  %1790 = vmatpush1.msra.mxu0 0.0
  %1791 = vmatprep.subr.mxu0 0.0
  %1792 = vmatpush1.msra.mxu0 0.0
  %1793 = vmatprep.subr.mxu0 0.0
  %1794 = vmatpush1.msra.mxu0 0.0
  %1795 = vmatprep.subr.mxu0 0.0
  %1796 = vmatpush1.msra.mxu0 0.0
  %1797 = vmatprep.subr.mxu0 0.0
  %1798 = vmatpush1.msra.mxu0 0.0
  %1799 = vmatprep.subr.mxu0 0.0
  %1800 = vmatpush1.msra.mxu0 0.0
  %1801 = vmatprep.subr.mxu0 0.0
  %1802 = vmatpush1.msra.mxu0 0.0
  %1803 = vmatprep.subr.mxu0 0.0
  %1804 = vmatpush1.msra.mxu0 0.0
  %1805 = vmatprep.subr.mxu0 0.0
  %1806 = vmatpush1.msra.mxu0 0.0
  %1807 = vmatprep.subr.mxu0 0.0
  %1808 = vmatpush1.msra.mxu0 0.0
  %1809 = vmatprep.mubr.f32.mxu0 0.0
  %1810 = vmatmul.mubr.f32.gmra.mrb[0].mxu0 %v1743
  %v1811 = vpop.f32.mrb[0].mxu0
  %v1812 = vadd.f32 0.0, %v1811
  %v1813 = vpop.f32.mrb[0].mxu0
  %1814 = vdwg.mxu0
  %1815 = vmatprep.subr.mxu0 0.0
  %1816 = vmatpush1.msra.mxu0 %v40
  %1817 = vmatprep.subr.mxu0 0.0
  %1818 = vmatpush1.msra.mxu0 %v41
  %1819 = vmatprep.subr.mxu0 0.0
  %1820 = vmatpush1.msra.mxu0 %v42
  %1821 = vmatprep.subr.mxu0 0.0
  %1822 = vmatpush1.msra.mxu0 %v43
  %1823 = vmatprep.subr.mxu0 0.0
  %1824 = vmatpush1.msra.mxu0 0.0
  %1825 = vmatprep.subr.mxu0 0.0
  %1826 = vmatpush1.msra.mxu0 0.0
  %1827 = vmatprep.subr.mxu0 0.0
  %1828 = vmatpush1.msra.mxu0 0.0
  %1829 = vmatprep.subr.mxu0 0.0
  %1830 = vmatpush1.msra.mxu0 0.0
  %1831 = vmatprep.subr.mxu0 0.0
  %1832 = vmatpush1.msra.mxu0 0.0
  %1833 = vmatprep.subr.mxu0 0.0
  %1834 = vmatpush1.msra.mxu0 0.0
  %1835 = vmatprep.subr.mxu0 0.0
  %1836 = vmatpush1.msra.mxu0 0.0
  %1837 = vmatprep.subr.mxu0 0.0
  %1838 = vmatpush1.msra.mxu0 0.0
  %1839 = vmatprep.subr.mxu0 0.0
  %1840 = vmatpush1.msra.mxu0 0.0
  %1841 = vmatprep.subr.mxu0 0.0
  %1842 = vmatpush1.msra.mxu0 0.0
  %1843 = vmatprep.subr.mxu0 0.0
  %1844 = vmatpush1.msra.mxu0 0.0
  %1845 = vmatprep.subr.mxu0 0.0
  %1846 = vmatpush1.msra.mxu0 0.0
  %1847 = vmatprep.subr.mxu0 0.0
  %1848 = vmatpush1.msra.mxu0 0.0
  %1849 = vmatprep.subr.mxu0 0.0
  %1850 = vmatpush1.msra.mxu0 0.0
  %1851 = vmatprep.subr.mxu0 0.0
  %1852 = vmatpush1.msra.mxu0 0.0
  %1853 = vmatprep.subr.mxu0 0.0
  %1854 = vmatpush1.msra.mxu0 0.0
  %1855 = vmatprep.subr.mxu0 0.0
  %1856 = vmatpush1.msra.mxu0 0.0
  %1857 = vmatprep.subr.mxu0 0.0
  %1858 = vmatpush1.msra.mxu0 0.0
  %1859 = vmatprep.subr.mxu0 0.0
  %1860 = vmatpush1.msra.mxu0 0.0
  %1861 = vmatprep.subr.mxu0 0.0
  %1862 = vmatpush1.msra.mxu0 0.0
  %1863 = vmatprep.subr.mxu0 0.0
  %1864 = vmatpush1.msra.mxu0 0.0
  %1865 = vmatprep.subr.mxu0 0.0
  %1866 = vmatpush1.msra.mxu0 0.0
  %1867 = vmatprep.subr.mxu0 0.0
  %1868 = vmatpush1.msra.mxu0 0.0
  %1869 = vmatprep.subr.mxu0 0.0
  %1870 = vmatpush1.msra.mxu0 0.0
  %1871 = vmatprep.subr.mxu0 0.0
  %1872 = vmatpush1.msra.mxu0 0.0
  %1873 = vmatprep.subr.mxu0 0.0
  %1874 = vmatpush1.msra.mxu0 0.0
  %1875 = vmatprep.subr.mxu0 0.0
  %1876 = vmatpush1.msra.mxu0 0.0
  %1877 = vmatprep.subr.mxu0 0.0
  %1878 = vmatpush1.msra.mxu0 0.0
  %1879 = vmatprep.mubr.f32.mxu0 0.0
  %1880 = vmatmul.mubr.f32.gmra.mrb[0].mxu0 %v1644
  %v1881 = vpop.f32.mrb[0].mxu0
  %v1882 = vadd.f32 %v1812, %v1881
  %v1883 = vpop.f32.mrb[0].mxu0
  %1884 = vdwg.mxu0
  %v1885 = vadd.f32 %v1882, %v543
  %v1886 = vmul.f32 %v1885, 0.5
  %v1887 = vsel %vm38, %v1885, %v1886
  %v1888 = vtanh.pop %v1887
  %v1889 = vmul.f32 %v1888, 0.5
  %v1890 = vadd.f32 %v1889, 0.5
  %v1891 = vsel %vm38, %v1888, %v1890
  %v1892 = vmul.f32 %v1891, %v1634
  %1894 = vrot.lane.b32.xlu0 %v1891, 64
  %v1895 = vpop.permute.xlu0 %1894
  %v1897 = vmul.f32 %v1891, %v1895
  %1899 = vrot.lane.b32.xlu0 %v1897, 32
  %v1900 = vpop.permute.xlu0 %1899
  %v1902 = vadd.f32 %v1892, %v1900
  %v1903 = vtanh.pop %v1902
  %1905 = vrot.lane.b32.xlu0 %v1903, 64
  %v1906 = vpop.permute.xlu0 %1905
  %v1908 = vmul.f32 %v1891, %v1906
  %1910 = vrot.lane.b32.xlu0 %v1739, 32
  %v1911 = vpop.permute.xlu0 %1910
  %v1912 = vsel %vm202, %v1911, 0
  %1914 = vmatprep.subr.mxu0 0.0
  %1915 = vmatpush1.msra.mxu0 %v44
  %1916 = vmatprep.subr.mxu0 0.0
  %1917 = vmatpush1.msra.mxu0 %v45
  %1918 = vmatprep.subr.mxu0 0.0
  %1919 = vmatpush1.msra.mxu0 %v46
  %1920 = vmatprep.subr.mxu0 0.0
  %1921 = vmatpush1.msra.mxu0 %v47
  %1922 = vmatprep.subr.mxu0 0.0
  %1923 = vmatpush1.msra.mxu0 0.0
  %1924 = vmatprep.subr.mxu0 0.0
  %1925 = vmatpush1.msra.mxu0 0.0
  %1926 = vmatprep.subr.mxu0 0.0
  %1927 = vmatpush1.msra.mxu0 0.0
  %1928 = vmatprep.subr.mxu0 0.0
  %1929 = vmatpush1.msra.mxu0 0.0
  %1930 = vmatprep.subr.mxu0 0.0
  %1931 = vmatpush1.msra.mxu0 0.0
  %1932 = vmatprep.subr.mxu0 0.0
  %1933 = vmatpush1.msra.mxu0 0.0
  %1934 = vmatprep.subr.mxu0 0.0
  %1935 = vmatpush1.msra.mxu0 0.0
  %1936 = vmatprep.subr.mxu0 0.0
  %1937 = vmatpush1.msra.mxu0 0.0
  %1938 = vmatprep.subr.mxu0 0.0
  %1939 = vmatpush1.msra.mxu0 0.0
  %1940 = vmatprep.subr.mxu0 0.0
  %1941 = vmatpush1.msra.mxu0 0.0
  %1942 = vmatprep.subr.mxu0 0.0
  %1943 = vmatpush1.msra.mxu0 0.0
  %1944 = vmatprep.subr.mxu0 0.0
  %1945 = vmatpush1.msra.mxu0 0.0
  %1946 = vmatprep.subr.mxu0 0.0
  %1947 = vmatpush1.msra.mxu0 0.0
  %1948 = vmatprep.subr.mxu0 0.0
  %1949 = vmatpush1.msra.mxu0 0.0
  %1950 = vmatprep.subr.mxu0 0.0
  %1951 = vmatpush1.msra.mxu0 0.0
  %1952 = vmatprep.subr.mxu0 0.0
  %1953 = vmatpush1.msra.mxu0 0.0
  %1954 = vmatprep.subr.mxu0 0.0
  %1955 = vmatpush1.msra.mxu0 0.0
  %1956 = vmatprep.subr.mxu0 0.0
  %1957 = vmatpush1.msra.mxu0 0.0
  %1958 = vmatprep.subr.mxu0 0.0
  %1959 = vmatpush1.msra.mxu0 0.0
  %1960 = vmatprep.subr.mxu0 0.0
  %1961 = vmatpush1.msra.mxu0 0.0
  %1962 = vmatprep.subr.mxu0 0.0
  %1963 = vmatpush1.msra.mxu0 0.0
  %1964 = vmatprep.subr.mxu0 0.0
  %1965 = vmatpush1.msra.mxu0 0.0
  %1966 = vmatprep.subr.mxu0 0.0
  %1967 = vmatpush1.msra.mxu0 0.0
  %1968 = vmatprep.subr.mxu0 0.0
  %1969 = vmatpush1.msra.mxu0 0.0
  %1970 = vmatprep.subr.mxu0 0.0
  %1971 = vmatpush1.msra.mxu0 0.0
  %1972 = vmatprep.subr.mxu0 0.0
  %1973 = vmatpush1.msra.mxu0 0.0
  %1974 = vmatprep.subr.mxu0 0.0
  %1975 = vmatpush1.msra.mxu0 0.0
  %1976 = vmatprep.subr.mxu0 0.0
  %1977 = vmatpush1.msra.mxu0 0.0
  %1978 = vmatprep.mubr.f32.mxu0 0.0
  %1979 = vmatmul.mubr.f32.gmra.mrb[0].mxu0 %v1912
  %v1980 = vpop.f32.mrb[0].mxu0
  %v1981 = vadd.f32 0.0, %v1980
  %v1982 = vpop.f32.mrb[0].mxu0
  %1983 = vdwg.mxu0
  %v1984 = vadd.f32 %v199, %v1981
  %v1985 = vmul.f32 %v1984, 0.5
  %v1986 = vsel %vm38, %v1984, %v1985
  %v1987 = vtanh.pop %v1986
  %v1988 = vmul.f32 %v1987, 0.5
  %v1989 = vadd.f32 %v1988, 0.5
  %v1990 = vsel %vm38, %v1987, %v1989
  %v1991 = vmul.f32 %v1990, %v1733
  %1993 = vrot.lane.b32.xlu0 %v1990, 64
  %v1994 = vpop.permute.xlu0 %1993
  %v1996 = vmul.f32 %v1990, %v1994
  %1998 = vrot.lane.b32.xlu0 %v1996, 32
  %v1999 = vpop.permute.xlu0 %1998
  %v2001 = vadd.f32 %v1991, %v1999
  %v2002 = vtanh.pop %v2001
  %2004 = vrot.lane.b32.xlu0 %v2002, 64
  %v2005 = vpop.permute.xlu0 %2004
  %v2007 = vmul.f32 %v1990, %v2005
  %2009 = vrot.lane.b32.xlu0 %v1908, 32
  %v2010 = vpop.permute.xlu0 %2009
  %v2011 = vsel %vm202, %v2010, 0
  %2013 = vmatprep.subr.mxu0 0.0
  %2014 = vmatpush1.msra.mxu0 %v48
  %2015 = vmatprep.subr.mxu0 0.0
  %2016 = vmatpush1.msra.mxu0 %v49
  %2017 = vmatprep.subr.mxu0 0.0
  %2018 = vmatpush1.msra.mxu0 %v50
  %2019 = vmatprep.subr.mxu0 0.0
  %2020 = vmatpush1.msra.mxu0 %v51
  %2021 = vmatprep.subr.mxu0 0.0
  %2022 = vmatpush1.msra.mxu0 0.0
  %2023 = vmatprep.subr.mxu0 0.0
  %2024 = vmatpush1.msra.mxu0 0.0
  %2025 = vmatprep.subr.mxu0 0.0
  %2026 = vmatpush1.msra.mxu0 0.0
  %2027 = vmatprep.subr.mxu0 0.0
  %2028 = vmatpush1.msra.mxu0 0.0
  %2029 = vmatprep.subr.mxu0 0.0
  %2030 = vmatpush1.msra.mxu0 0.0
  %2031 = vmatprep.subr.mxu0 0.0
  %2032 = vmatpush1.msra.mxu0 0.0
  %2033 = vmatprep.subr.mxu0 0.0
  %2034 = vmatpush1.msra.mxu0 0.0
  %2035 = vmatprep.subr.mxu0 0.0
  %2036 = vmatpush1.msra.mxu0 0.0
  %2037 = vmatprep.subr.mxu0 0.0
  %2038 = vmatpush1.msra.mxu0 0.0
  %2039 = vmatprep.subr.mxu0 0.0
  %2040 = vmatpush1.msra.mxu0 0.0
  %2041 = vmatprep.subr.mxu0 0.0
  %2042 = vmatpush1.msra.mxu0 0.0
  %2043 = vmatprep.subr.mxu0 0.0
  %2044 = vmatpush1.msra.mxu0 0.0
  %2045 = vmatprep.subr.mxu0 0.0
  %2046 = vmatpush1.msra.mxu0 0.0
  %2047 = vmatprep.subr.mxu0 0.0
  %2048 = vmatpush1.msra.mxu0 0.0
  %2049 = vmatprep.subr.mxu0 0.0
  %2050 = vmatpush1.msra.mxu0 0.0
  %2051 = vmatprep.subr.mxu0 0.0
  %2052 = vmatpush1.msra.mxu0 0.0
  %2053 = vmatprep.subr.mxu0 0.0
  %2054 = vmatpush1.msra.mxu0 0.0
  %2055 = vmatprep.subr.mxu0 0.0
  %2056 = vmatpush1.msra.mxu0 0.0
  %2057 = vmatprep.subr.mxu0 0.0
  %2058 = vmatpush1.msra.mxu0 0.0
  %2059 = vmatprep.subr.mxu0 0.0
  %2060 = vmatpush1.msra.mxu0 0.0
  %2061 = vmatprep.subr.mxu0 0.0
  %2062 = vmatpush1.msra.mxu0 0.0
  %2063 = vmatprep.subr.mxu0 0.0
  %2064 = vmatpush1.msra.mxu0 0.0
  %2065 = vmatprep.subr.mxu0 0.0
  %2066 = vmatpush1.msra.mxu0 0.0
  %2067 = vmatprep.subr.mxu0 0.0
  %2068 = vmatpush1.msra.mxu0 0.0
  %2069 = vmatprep.subr.mxu0 0.0
  %2070 = vmatpush1.msra.mxu0 0.0
  %2071 = vmatprep.subr.mxu0 0.0
  %2072 = vmatpush1.msra.mxu0 0.0
  %2073 = vmatprep.subr.mxu0 0.0
  %2074 = vmatpush1.msra.mxu0 0.0
  %2075 = vmatprep.subr.mxu0 0.0
  %2076 = vmatpush1.msra.mxu0 0.0
  %2077 = vmatprep.mubr.f32.mxu0 0.0
  %2078 = vmatmul.mubr.f32.gmra.mrb[0].mxu0 %v2011
  %v2079 = vpop.f32.mrb[0].mxu0
  %v2080 = vadd.f32 0.0, %v2079
  %v2081 = vpop.f32.mrb[0].mxu0
  %2082 = vdwg.mxu0
  %2083 = vmatprep.subr.mxu0 0.0
  %2084 = vmatpush1.msra.mxu0 %v40
  %2085 = vmatprep.subr.mxu0 0.0
  %2086 = vmatpush1.msra.mxu0 %v41
  %2087 = vmatprep.subr.mxu0 0.0
  %2088 = vmatpush1.msra.mxu0 %v42
  %2089 = vmatprep.subr.mxu0 0.0
  %2090 = vmatpush1.msra.mxu0 %v43
  %2091 = vmatprep.subr.mxu0 0.0
  %2092 = vmatpush1.msra.mxu0 0.0
  %2093 = vmatprep.subr.mxu0 0.0
  %2094 = vmatpush1.msra.mxu0 0.0
  %2095 = vmatprep.subr.mxu0 0.0
  %2096 = vmatpush1.msra.mxu0 0.0
  %2097 = vmatprep.subr.mxu0 0.0
  %2098 = vmatpush1.msra.mxu0 0.0
  %2099 = vmatprep.subr.mxu0 0.0
  %2100 = vmatpush1.msra.mxu0 0.0
  %2101 = vmatprep.subr.mxu0 0.0
  %2102 = vmatpush1.msra.mxu0 0.0
  %2103 = vmatprep.subr.mxu0 0.0
  %2104 = vmatpush1.msra.mxu0 0.0
  %2105 = vmatprep.subr.mxu0 0.0
  %2106 = vmatpush1.msra.mxu0 0.0
  %2107 = vmatprep.subr.mxu0 0.0
  %2108 = vmatpush1.msra.mxu0 0.0
  %2109 = vmatprep.subr.mxu0 0.0
  %2110 = vmatpush1.msra.mxu0 0.0
  %2111 = vmatprep.subr.mxu0 0.0
  %2112 = vmatpush1.msra.mxu0 0.0
  %2113 = vmatprep.subr.mxu0 0.0
  %2114 = vmatpush1.msra.mxu0 0.0
  %2115 = vmatprep.subr.mxu0 0.0
  %2116 = vmatpush1.msra.mxu0 0.0
  %2117 = vmatprep.subr.mxu0 0.0
  %2118 = vmatpush1.msra.mxu0 0.0
  %2119 = vmatprep.subr.mxu0 0.0
  %2120 = vmatpush1.msra.mxu0 0.0
  %2121 = vmatprep.subr.mxu0 0.0
  %2122 = vmatpush1.msra.mxu0 0.0
  %2123 = vmatprep.subr.mxu0 0.0
  %2124 = vmatpush1.msra.mxu0 0.0
  %2125 = vmatprep.subr.mxu0 0.0
  %2126 = vmatpush1.msra.mxu0 0.0
  %2127 = vmatprep.subr.mxu0 0.0
  %2128 = vmatpush1.msra.mxu0 0.0
  %2129 = vmatprep.subr.mxu0 0.0
  %2130 = vmatpush1.msra.mxu0 0.0
  %2131 = vmatprep.subr.mxu0 0.0
  %2132 = vmatpush1.msra.mxu0 0.0
  %2133 = vmatprep.subr.mxu0 0.0
  %2134 = vmatpush1.msra.mxu0 0.0
  %2135 = vmatprep.subr.mxu0 0.0
  %2136 = vmatpush1.msra.mxu0 0.0
  %2137 = vmatprep.subr.mxu0 0.0
  %2138 = vmatpush1.msra.mxu0 0.0
  %2139 = vmatprep.subr.mxu0 0.0
  %2140 = vmatpush1.msra.mxu0 0.0
  %2141 = vmatprep.subr.mxu0 0.0
  %2142 = vmatpush1.msra.mxu0 0.0
  %2143 = vmatprep.subr.mxu0 0.0
  %2144 = vmatpush1.msra.mxu0 0.0
  %2145 = vmatprep.subr.mxu0 0.0
  %2146 = vmatpush1.msra.mxu0 0.0
  %2147 = vmatprep.mubr.f32.mxu0 0.0
  %2148 = vmatmul.mubr.f32.gmra.mrb[0].mxu0 %v1912
  %v2149 = vpop.f32.mrb[0].mxu0
  %v2150 = vadd.f32 %v2080, %v2149
  %v2151 = vpop.f32.mrb[0].mxu0
  %2152 = vdwg.mxu0
  %v2153 = vadd.f32 %v2150, %v543
  %v2154 = vmul.f32 %v2153, 0.5
  %v2155 = vsel %vm38, %v2153, %v2154
  %v2156 = vtanh.pop %v2155
  %v2157 = vmul.f32 %v2156, 0.5
  %v2158 = vadd.f32 %v2157, 0.5
  %v2159 = vsel %vm38, %v2156, %v2158
  %v2160 = vmul.f32 %v2159, %v1902
  %2162 = vrot.lane.b32.xlu0 %v2159, 64
  %v2163 = vpop.permute.xlu0 %2162
  %v2165 = vmul.f32 %v2159, %v2163
  %2167 = vrot.lane.b32.xlu0 %v2165, 32
  %v2168 = vpop.permute.xlu0 %2167
  %v2170 = vadd.f32 %v2160, %v2168
  %v2171 = vtanh.pop %v2170
  %2173 = vrot.lane.b32.xlu0 %v2171, 64
  %v2174 = vpop.permute.xlu0 %2173
  %v2176 = vmul.f32 %v2159, %v2174
  %2178 = vrot.lane.b32.xlu0 %v2176, 32
  %v2179 = vpop.permute.xlu0 %2178
  %v2180 = vsel %vm202, %v2179, 0
  %2182 = vmatprep.subr.mxu0 0.0
  %2183 = vmatpush1.msra.mxu0 %v48
  %2184 = vmatprep.subr.mxu0 0.0
  %2185 = vmatpush1.msra.mxu0 %v49
  %2186 = vmatprep.subr.mxu0 0.0
  %2187 = vmatpush1.msra.mxu0 %v50
  %2188 = vmatprep.subr.mxu0 0.0
  %2189 = vmatpush1.msra.mxu0 %v51
  %2190 = vmatprep.subr.mxu0 0.0
  %2191 = vmatpush1.msra.mxu0 0.0
  %2192 = vmatprep.subr.mxu0 0.0
  %2193 = vmatpush1.msra.mxu0 0.0
  %2194 = vmatprep.subr.mxu0 0.0
  %2195 = vmatpush1.msra.mxu0 0.0
  %2196 = vmatprep.subr.mxu0 0.0
  %2197 = vmatpush1.msra.mxu0 0.0
  %2198 = vmatprep.subr.mxu0 0.0
  %2199 = vmatpush1.msra.mxu0 0.0
  %2200 = vmatprep.subr.mxu0 0.0
  %2201 = vmatpush1.msra.mxu0 0.0
  %2202 = vmatprep.subr.mxu0 0.0
  %2203 = vmatpush1.msra.mxu0 0.0
  %2204 = vmatprep.subr.mxu0 0.0
  %2205 = vmatpush1.msra.mxu0 0.0
  %2206 = vmatprep.subr.mxu0 0.0
  %2207 = vmatpush1.msra.mxu0 0.0
  %2208 = vmatprep.subr.mxu0 0.0
  %2209 = vmatpush1.msra.mxu0 0.0
  %2210 = vmatprep.subr.mxu0 0.0
  %2211 = vmatpush1.msra.mxu0 0.0
  %2212 = vmatprep.subr.mxu0 0.0
  %2213 = vmatpush1.msra.mxu0 0.0
  %2214 = vmatprep.subr.mxu0 0.0
  %2215 = vmatpush1.msra.mxu0 0.0
  %2216 = vmatprep.subr.mxu0 0.0
  %2217 = vmatpush1.msra.mxu0 0.0
  %2218 = vmatprep.subr.mxu0 0.0
  %2219 = vmatpush1.msra.mxu0 0.0
  %2220 = vmatprep.subr.mxu0 0.0
  %2221 = vmatpush1.msra.mxu0 0.0
  %2222 = vmatprep.subr.mxu0 0.0
  %2223 = vmatpush1.msra.mxu0 0.0
  %2224 = vmatprep.subr.mxu0 0.0
  %2225 = vmatpush1.msra.mxu0 0.0
  %2226 = vmatprep.subr.mxu0 0.0
  %2227 = vmatpush1.msra.mxu0 0.0
  %2228 = vmatprep.subr.mxu0 0.0
  %2229 = vmatpush1.msra.mxu0 0.0
  %2230 = vmatprep.subr.mxu0 0.0
  %2231 = vmatpush1.msra.mxu0 0.0
  %2232 = vmatprep.subr.mxu0 0.0
  %2233 = vmatpush1.msra.mxu0 0.0
  %2234 = vmatprep.subr.mxu0 0.0
  %2235 = vmatpush1.msra.mxu0 0.0
  %2236 = vmatprep.subr.mxu0 0.0
  %2237 = vmatpush1.msra.mxu0 0.0
  %2238 = vmatprep.subr.mxu0 0.0
  %2239 = vmatpush1.msra.mxu0 0.0
  %2240 = vmatprep.subr.mxu0 0.0
  %2241 = vmatpush1.msra.mxu0 0.0
  %2242 = vmatprep.subr.mxu0 0.0
  %2243 = vmatpush1.msra.mxu0 0.0
  %2244 = vmatprep.subr.mxu0 0.0
  %2245 = vmatpush1.msra.mxu0 0.0
  %2246 = vmatprep.mubr.f32.mxu0 0.0
  %2247 = vmatmul.mubr.f32.gmra.mrb[0].mxu0 %v2180
  %v2248 = vpop.f32.mrb[0].mxu0
  %v2249 = vadd.f32 0.0, %v2248
  %v2250 = vpop.f32.mrb[0].mxu0
  %2251 = vdwg.mxu0
  %2253 = vrot.lane.b32.xlu0 %v2007, 32
  %v2254 = vpop.permute.xlu0 %2253
  %v2255 = vsel %vm202, %v2254, 0
  %2257 = vmatprep.subr.mxu0 0.0
  %2258 = vmatpush1.msra.mxu0 %v40
  %2259 = vmatprep.subr.mxu0 0.0
  %2260 = vmatpush1.msra.mxu0 %v41
  %2261 = vmatprep.subr.mxu0 0.0
  %2262 = vmatpush1.msra.mxu0 %v42
  %2263 = vmatprep.subr.mxu0 0.0
  %2264 = vmatpush1.msra.mxu0 %v43
  %2265 = vmatprep.subr.mxu0 0.0
  %2266 = vmatpush1.msra.mxu0 0.0
  %2267 = vmatprep.subr.mxu0 0.0
  %2268 = vmatpush1.msra.mxu0 0.0
  %2269 = vmatprep.subr.mxu0 0.0
  %2270 = vmatpush1.msra.mxu0 0.0
  %2271 = vmatprep.subr.mxu0 0.0
  %2272 = vmatpush1.msra.mxu0 0.0
  %2273 = vmatprep.subr.mxu0 0.0
  %2274 = vmatpush1.msra.mxu0 0.0
  %2275 = vmatprep.subr.mxu0 0.0
  %2276 = vmatpush1.msra.mxu0 0.0
  %2277 = vmatprep.subr.mxu0 0.0
  %2278 = vmatpush1.msra.mxu0 0.0
  %2279 = vmatprep.subr.mxu0 0.0
  %2280 = vmatpush1.msra.mxu0 0.0
  %2281 = vmatprep.subr.mxu0 0.0
  %2282 = vmatpush1.msra.mxu0 0.0
  %2283 = vmatprep.subr.mxu0 0.0
  %2284 = vmatpush1.msra.mxu0 0.0
  %2285 = vmatprep.subr.mxu0 0.0
  %2286 = vmatpush1.msra.mxu0 0.0
  %2287 = vmatprep.subr.mxu0 0.0
  %2288 = vmatpush1.msra.mxu0 0.0
  %2289 = vmatprep.subr.mxu0 0.0
  %2290 = vmatpush1.msra.mxu0 0.0
  %2291 = vmatprep.subr.mxu0 0.0
  %2292 = vmatpush1.msra.mxu0 0.0
  %2293 = vmatprep.subr.mxu0 0.0
  %2294 = vmatpush1.msra.mxu0 0.0
  %2295 = vmatprep.subr.mxu0 0.0
  %2296 = vmatpush1.msra.mxu0 0.0
  %2297 = vmatprep.subr.mxu0 0.0
  %2298 = vmatpush1.msra.mxu0 0.0
  %2299 = vmatprep.subr.mxu0 0.0
  %2300 = vmatpush1.msra.mxu0 0.0
  %2301 = vmatprep.subr.mxu0 0.0
  %2302 = vmatpush1.msra.mxu0 0.0
  %2303 = vmatprep.subr.mxu0 0.0
  %2304 = vmatpush1.msra.mxu0 0.0
  %2305 = vmatprep.subr.mxu0 0.0
  %2306 = vmatpush1.msra.mxu0 0.0
  %2307 = vmatprep.subr.mxu0 0.0
  %2308 = vmatpush1.msra.mxu0 0.0
  %2309 = vmatprep.subr.mxu0 0.0
  %2310 = vmatpush1.msra.mxu0 0.0
  %2311 = vmatprep.subr.mxu0 0.0
  %2312 = vmatpush1.msra.mxu0 0.0
  %2313 = vmatprep.subr.mxu0 0.0
  %2314 = vmatpush1.msra.mxu0 0.0
  %2315 = vmatprep.subr.mxu0 0.0
  %2316 = vmatpush1.msra.mxu0 0.0
  %2317 = vmatprep.subr.mxu0 0.0
  %2318 = vmatpush1.msra.mxu0 0.0
  %2319 = vmatprep.subr.mxu0 0.0
  %2320 = vmatpush1.msra.mxu0 0.0
  %2321 = vmatprep.mubr.f32.mxu0 0.0
  %2322 = vmatmul.mubr.f32.gmra.mrb[0].mxu0 %v2255
  %v2323 = vpop.f32.mrb[0].mxu0
  %v2324 = vadd.f32 %v2249, %v2323
  %v2325 = vpop.f32.mrb[0].mxu0
  %2326 = vdwg.mxu0
  %v2327 = vadd.f32 %v2324, %v543
  %v2328 = vmul.f32 %v2327, 0.5
  %v2329 = vsel %vm38, %v2327, %v2328
  %v2330 = vtanh.pop %v2329
  %v2331 = vmul.f32 %v2330, 0.5
  %v2332 = vadd.f32 %v2331, 0.5
  %v2333 = vsel %vm38, %v2330, %v2332
  %v2334 = vmul.f32 %v2333, %v2170
  %2336 = vrot.lane.b32.xlu0 %v2333, 64
  %v2337 = vpop.permute.xlu0 %2336
  %v2339 = vmul.f32 %v2333, %v2337
  %2341 = vrot.lane.b32.xlu0 %v2339, 32
  %v2342 = vpop.permute.xlu0 %2341
  %v2344 = vadd.f32 %v2334, %v2342
  %v2345 = vtanh.pop %v2344
  %2347 = vrot.lane.b32.xlu0 %v2345, 64
  %v2348 = vpop.permute.xlu0 %2347
  %v2350 = vmul.f32 %v2333, %v2348
  %v2351 = vmax.f32 %v2350, 0.0
  %v2352 = vld [vmem:[%s7] sm:$0xff]
  %v2353 = vld [vmem:[%s7 + $0x8] sm:$0xff]
  %v2354 = vld [vmem:[%s7 + $0x10] sm:$0xff]
  %v2355 = vld [vmem:[%s7 + $0x18] sm:$0xff]
  %v2356 = vld [vmem:[#allocation2] sm:$0x1]
  %v2358 = vlaneseq
  %v2359 = vshrl.u32 %v2358, 7
  %v2360 = vsub.s32 0, %v2359
  %v2361 = vrot.slane %v2356, %v2360
  %2364 = vrot.lane.b32.xlu0 %v2351, 32
  %v2365 = vpop.permute.xlu0 %2364
  %v2366 = vsel %vm202, %v2365, 0
  %2368 = vmatprep.subr.mxu0 0.0
  %2369 = vmatpush1.msra.mxu0 %v2352
  %2370 = vmatprep.subr.mxu0 0.0
  %2371 = vmatpush1.msra.mxu0 %v2353
  %2372 = vmatprep.subr.mxu0 0.0
  %2373 = vmatpush1.msra.mxu0 %v2354
  %2374 = vmatprep.subr.mxu0 0.0
  %2375 = vmatpush1.msra.mxu0 %v2355
  %2376 = vmatprep.subr.mxu0 0.0
  %2377 = vmatpush1.msra.mxu0 0.0
  %2378 = vmatprep.subr.mxu0 0.0
  %2379 = vmatpush1.msra.mxu0 0.0
  %2380 = vmatprep.subr.mxu0 0.0
  %2381 = vmatpush1.msra.mxu0 0.0
  %2382 = vmatprep.subr.mxu0 0.0
  %2383 = vmatpush1.msra.mxu0 0.0
  %2384 = vmatprep.subr.mxu0 0.0
  %2385 = vmatpush1.msra.mxu0 0.0
  %2386 = vmatprep.subr.mxu0 0.0
  %2387 = vmatpush1.msra.mxu0 0.0
  %2388 = vmatprep.subr.mxu0 0.0
  %2389 = vmatpush1.msra.mxu0 0.0
  %2390 = vmatprep.subr.mxu0 0.0
  %2391 = vmatpush1.msra.mxu0 0.0
  %2392 = vmatprep.subr.mxu0 0.0
  %2393 = vmatpush1.msra.mxu0 0.0
  %2394 = vmatprep.subr.mxu0 0.0
  %2395 = vmatpush1.msra.mxu0 0.0
  %2396 = vmatprep.subr.mxu0 0.0
  %2397 = vmatpush1.msra.mxu0 0.0
  %2398 = vmatprep.subr.mxu0 0.0
  %2399 = vmatpush1.msra.mxu0 0.0
  %2400 = vmatprep.subr.mxu0 0.0
  %2401 = vmatpush1.msra.mxu0 0.0
  %2402 = vmatprep.subr.mxu0 0.0
  %2403 = vmatpush1.msra.mxu0 0.0
  %2404 = vmatprep.subr.mxu0 0.0
  %2405 = vmatpush1.msra.mxu0 0.0
  %2406 = vmatprep.subr.mxu0 0.0
  %2407 = vmatpush1.msra.mxu0 0.0
  %2408 = vmatprep.subr.mxu0 0.0
  %2409 = vmatpush1.msra.mxu0 0.0
  %2410 = vmatprep.subr.mxu0 0.0
  %2411 = vmatpush1.msra.mxu0 0.0
  %2412 = vmatprep.subr.mxu0 0.0
  %2413 = vmatpush1.msra.mxu0 0.0
  %2414 = vmatprep.subr.mxu0 0.0
  %2415 = vmatpush1.msra.mxu0 0.0
  %2416 = vmatprep.subr.mxu0 0.0
  %2417 = vmatpush1.msra.mxu0 0.0
  %2418 = vmatprep.subr.mxu0 0.0
  %2419 = vmatpush1.msra.mxu0 0.0
  %2420 = vmatprep.subr.mxu0 0.0
  %2421 = vmatpush1.msra.mxu0 0.0
  %2422 = vmatprep.subr.mxu0 0.0
  %2423 = vmatpush1.msra.mxu0 0.0
  %2424 = vmatprep.subr.mxu0 0.0
  %2425 = vmatpush1.msra.mxu0 0.0
  %2426 = vmatprep.subr.mxu0 0.0
  %2427 = vmatpush1.msra.mxu0 0.0
  %2428 = vmatprep.subr.mxu0 0.0
  %2429 = vmatpush1.msra.mxu0 0.0
  %2430 = vmatprep.subr.mxu0 0.0
  %2431 = vmatpush1.msra.mxu0 0.0
  %2432 = vmatprep.mubr.f32.mxu0 0.0
  %2433 = vmatmul.mubr.f32.gmra.mrb[0].mxu0 %v2366
  %v2434 = vpop.f32.mrb[0].mxu0
  %v2435 = vadd.f32 %v2361, %v2434
  %v2436 = vpop.f32.mrb[0].mxu0
  %2437 = vdwg.mxu0
  %vm2438 = vcmask 7168
  %2439 = vst.msk [vmem:[%s9] sm:$0xff] %vm2438, %v2435
  // Predicated region
  $region38: #{tpu_custom_call.1} parent=0 // pred_check
    _
  $region39: #{tpu_custom_call.1} parent=0 // pred_check_branch
    %2441 = sbr.rel (0) target = $region41
  $region40: #{tpu_custom_call.1} parent=0 // pred_region
    _
  $region41: #{tpu_custom_call.1} parent=0 // pred_fallthru
    _
  // Predicated region
  $region42: #{tpu_custom_call.1} parent=0 // pred_check
    _
  $region43: #{tpu_custom_call.1} parent=0 // pred_check_branch
    %2443 = sbr.rel (0) target = $region45
  $region44: #{tpu_custom_call.1} parent=0 // pred_region
    _
  $region45: #{tpu_custom_call.1} parent=0 // pred_fallthru
    _

</llo_original>
